<compile_context>
chip_gen: v7x
topology: tpu7x:2x2x1
jax: 0.10.0
libtpu: 0.0.40
codegen_flags: <defaults>
</compile_context>

<pallas_src>
import math
from functools import partial

import jax
import jax.numpy as jnp
from jax.experimental import pallas as pl
from jax.experimental.pallas import tpu as pltpu


def _gelu_new(x):
    # GPT-2 "gelu_new": 0.5*x*(1+tanh(sqrt(2/pi)*(x+0.044715*x^3)))
    c = math.sqrt(2.0 / math.pi)
    return 0.5 * x * (1.0 + jnp.tanh(c * (x + 0.044715 * x * x * x)))


def _round_up(a, b):
    return ((a + b - 1) // b) * b


# --------------------------------------------------------------------------- #
# Kernel
# --------------------------------------------------------------------------- #
def _mlp_kernel(x_ref, wfc_ref, bfc_ref, wproj_ref, bproj_ref, o_ref, acc_ref,
                *, act_dtype):
    # Grid: (row tiles "parallel", n_state chunks "arbitrary" = reduction last).
    # x_ref:     (tm, nx)   original dtype (cast to bf16 here, under the matmul)
    # wfc_ref:   (nx, tk)   bf16      bfc_ref:   (1, tk)  f32
    # wproj_ref: (tk, nx)   bf16      bproj_ref: (1, nx)  f32
    # o_ref:     (tm, nx)   out dtype acc_ref:   (tm, nx) f32 scratch
    k = pl.program_id(1)

    @pl.when(k == 0)
    def _init():
        acc_ref[...] = jnp.zeros_like(acc_ref)

    # c_fc chunk: bf16 operands on the MXU, f32 accumulation.  x arrives in its
    # original dtype (no wrapper-side cast/pad pass over HBM).
    # TODO(synk): when grid_k > 1 the x->bf16 cast is repeated per chunk; could
    # be cached in a bf16 scratch at k == 0 (cost is ~tm*nx VPU ops vs
    # tm*nx*tk MACs, so it is noise).
    xb = x_ref[...].astype(jnp.bfloat16)
    h = jnp.dot(xb, wfc_ref[...], preferred_element_type=jnp.float32)
    h = h + bfc_ref[...]

    # gelu_new on the VPU/EUP: bf16 on v6e/v7x (bf16 VALU/EUP), f32 on v5e/v4.
    h = _gelu_new(h.astype(act_dtype))

    # c_proj chunk, accumulated in f32 across the n_state grid axis.
    acc_ref[...] += jnp.dot(h.astype(jnp.bfloat16), wproj_ref[...],
                            preferred_element_type=jnp.float32)

    @pl.when(k == pl.num_programs(1) - 1)
    def _finish():
        # TODO(synk): nn.Dropout(resid_pdrop) is identity in eval mode;
        # training-mode dropout would use pltpu.prng_seed/prng_random_bits.
        o_ref[...] = (acc_ref[...] + bproj_ref[...]).astype(o_ref.dtype)


# --------------------------------------------------------------------------- #
# Tiling / hardware heuristics
# --------------------------------------------------------------------------- #
def _detect_act_dtype():
    try:
        kind = jax.devices()[0].device_kind.lower()
    except Exception:
        return jnp.float32
    # v6e / v7x have bf16 VALU+EUP (2x packing for the gelu polynomial);
    # v5e / v4 do not -> keep the activation math in f32 there.
    if "v6" in kind or "v7" in kind:
        return jnp.bfloat16
    return jnp.float32


def _default_vmem_limit_bytes():
    cap = None
    try:
        cap = getattr(pltpu.get_tpu_info(), "vmem_capacity_bytes", None)
    except Exception:
        cap = None
    if not cap:
        cap = 64 * 1024 * 1024  # conservative floor: v7x physical VMEM per TC
    return int(cap * 0.8)       # ~20% headroom for Mosaic internal scratch


def _pick_row_tiling(M, tm_target=512):
    grid_m = max(1, pl.cdiv(M, tm_target))
    if grid_m < 2 and M > 16:
        # Keep >= 2 row tiles so the "parallel" row axis can occupy both
        # v7x TensorCores even at small / decode-sized M.
        grid_m = 2
    tm = pl.cdiv(M, grid_m)
    # 256-row alignment keeps MXU rows full; tiny M only needs the 16-row
    # sublane alignment (the edge block is partial anyway, no wrapper pad).
    tm = _round_up(tm, 256 if tm > 256 else 16)
    grid_m = pl.cdiv(M, tm)
    return tm, grid_m


def _vmem_bytes_estimate(tm, tk, nx, x_itemsize, out_itemsize, resident):
    wbuf = 1 if resident else 2               # Buffered(1) when fully resident
    b = 2 * tm * nx * x_itemsize              # x tile (double-buffered)
    b += wbuf * nx * tk * 2                   # W_fc chunk (bf16)
    b += wbuf * tk * nx * 2                   # W_proj chunk (bf16)
    b += 2 * tm * nx * out_itemsize           # output tile
    b += tm * nx * 4                          # f32 accumulator scratch
    b += tm * tk * 10                         # matmul / gelu temporaries
    return b


def _pick_tk(n_state, tm, nx, x_itemsize, out_itemsize, budget):
    # n_state must be divisible by tk: a ragged K chunk would push garbage
    # columns through gelu into the accumulation.
    cands = [d for d in range(128, n_state + 1, 128) if n_state % d == 0]
    if n_state not in cands:
        cands.append(n_state)
    for tk in sorted(cands, reverse=True):
        if _vmem_bytes_estimate(tm, tk, nx, x_itemsize, out_itemsize,
                                resident=(tk == n_state)) <= budget:
            return tk
    return min(cands)


# --------------------------------------------------------------------------- #
# Wrapper
# --------------------------------------------------------------------------- #
def mlp_forward(x, w_fc, b_fc, w_proj, b_proj, *, tm_target=512, tk=None,
                out_dtype=None, vmem_limit_bytes=None):
    """GPT-2 MLP: gelu_new(x @ W_fc + b_fc) @ W_proj + b_proj (dropout = eval identity).

    x: (B, T, nx); W_fc: (nx, n_state), b_fc: (n_state,);
    W_proj: (n_state, nx), b_proj: (nx,).  Returns (B, T, nx).
    """
    B, T, nx = x.shape
    n_state = w_fc.shape[1]
    assert w_fc.shape == (nx, n_state)
    assert w_proj.shape == (n_state, nx)
    M = B * T

    out_dtype = x.dtype if out_dtype is None else out_dtype
    if vmem_limit_bytes is None:
        vmem_limit_bytes = _default_vmem_limit_bytes()
    act_dtype = _detect_act_dtype()

    x_itemsize = jnp.dtype(x.dtype).itemsize
    out_itemsize = jnp.dtype(out_dtype).itemsize
    tm, grid_m = _pick_row_tiling(M, tm_target)
    if tk is None:
        tk = _pick_tk(n_state, tm, nx, x_itemsize, out_itemsize,
                      budget=int(0.7 * vmem_limit_bytes))
    assert n_state % tk == 0, "tk must divide n_state exactly"
    grid_k = n_state // tk
    weights_resident = grid_k == 1   # index_map constant over the whole grid

    # bf16 MXU operands for the weights (halves HBM traffic / VMEM residency,
    # ~2x MXU throughput).  In a real model these casts happen once at load.
    wfc_b = w_fc.astype(jnp.bfloat16)
    wproj_b = w_proj.astype(jnp.bfloat16)
    bfc2 = b_fc.reshape(1, n_state).astype(jnp.float32)
    bproj2 = b_proj.reshape(1, nx).astype(jnp.float32)
    # Activations: no wrapper-side cast or pad; the (possibly partial) edge
    # row tile is handled by the grid and the masked output store.
    x2 = x.reshape(M, nx)

    weight_refetch = grid_m if grid_k > 1 else 1
    cost = pl.CostEstimate(
        flops=4 * M * nx * n_state,               # two matmuls
        transcendentals=M * n_state,              # tanh in gelu_new
        bytes_accessed=(M * nx * x_itemsize
                        + weight_refetch * (wfc_b.size + wproj_b.size) * 2
                        + bfc2.size * 4 + bproj2.size * 4
                        + M * nx * out_itemsize),
    )

    def build(single_buffer_resident):
        def spec(shape, index_map, resident):
            if resident and single_buffer_resident:
                # Constant index_map across the grid: a single VMEM buffer is
                # enough (no point double-buffering data never re-fetched).
                return pl.BlockSpec(shape, index_map,
                                    pipeline_mode=pl.Buffered(1))
            return pl.BlockSpec(shape, index_map)

        grid_spec = pltpu.PrefetchScalarGridSpec(
            num_scalar_prefetch=0,
            grid=(grid_m, grid_k),
            in_specs=[
                pl.BlockSpec((tm, nx), lambda i, k: (i, 0)),             # x rows
                spec((nx, tk), lambda i, k: (0, k), weights_resident),   # W_fc
                spec((1, tk), lambda i, k: (0, k), weights_resident),    # b_fc
                spec((tk, nx), lambda i, k: (k, 0), weights_resident),   # W_proj
                spec((1, nx), lambda i, k: (0, 0), True),                # b_proj
            ],
            out_specs=pl.BlockSpec((tm, nx), lambda i, k: (i, 0)),
            scratch_shapes=[pltpu.VMEM((tm, nx), jnp.float32)],
        )
        return pl.pallas_call(
            partial(_mlp_kernel, act_dtype=act_dtype),
            out_shape=jax.ShapeDtypeStruct((M, nx), out_dtype),
            grid_spec=grid_spec,
            compiler_params=pltpu.CompilerParams(
                dimension_semantics=("parallel", "arbitrary"),
                vmem_limit_bytes=vmem_limit_bytes,
            ),
            cost_estimate=cost,
        )

    try:
        out = build(single_buffer_resident=True)(x2, wfc_b, bfc2, wproj_b, bproj2)
    except Exception:
        # pl.Buffered(1) (single-buffered resident blocks) not supported on
        # this jax build -> retry with default double buffering (VMEM-only
        # cost, identical semantics).
        out = build(single_buffer_resident=False)(x2, wfc_b, bfc2, wproj_b, bproj2)

    return out.reshape(B, T, nx)


# --------------------------------------------------------------------------- #
# Pure-JAX reference mirroring the kernel's bf16 casts / activation dtype.
# --------------------------------------------------------------------------- #
def _reference(x, w_fc, b_fc, w_proj, b_proj, act_dtype):
    B, T, nx = x.shape
    xb = x.reshape(-1, nx).astype(jnp.bfloat16).astype(jnp.float32)
    wfcb = w_fc.astype(jnp.bfloat16).astype(jnp.float32)
    wprojb = w_proj.astype(jnp.bfloat16).astype(jnp.float32)
    h = xb @ wfcb + b_fc.reshape(1, -1)
    h = _gelu_new(h.astype(act_dtype)).astype(jnp.float32)
    h = h.astype(jnp.bfloat16).astype(jnp.float32)
    out = h @ wprojb + b_proj.reshape(1, -1)
    return out.reshape(B, T, nx).astype(x.dtype)


if __name__ == "__main__":
    # Small GPT-2-like config with lane-aligned dims: n_embd=128, n_state=512.
    B, T, n_embd = 2, 64, 128
    n_state = 4 * n_embd

    key = jax.random.PRNGKey(0)
    k_x, k_wfc, k_bfc, k_wproj, k_bproj = jax.random.split(key, 5)

    x = jax.random.normal(k_x, (B, T, n_embd), dtype=jnp.float32)
    # Conv1D init (GPT-2 style): weight ~ N(0, 0.02); small nonzero biases to
    # exercise the bias-add path.
    w_fc = 0.02 * jax.random.normal(k_wfc, (n_embd, n_state), dtype=jnp.float32)
    b_fc = 0.02 * jax.random.normal(k_bfc, (n_state,), dtype=jnp.float32)
    w_proj = 0.02 * jax.random.normal(k_wproj, (n_state, n_embd), dtype=jnp.float32)
    b_proj = 0.02 * jax.random.normal(k_bproj, (n_embd,), dtype=jnp.float32)

    act_dtype = _detect_act_dtype()

    # 1) Resident-weight path: grid_k == 1 (Buffered(1) weights), grid_m == 2
    #    so both v7x TensorCores get a row tile.
    out = jax.block_until_ready(mlp_forward(x, w_fc, b_fc, w_proj, b_proj))
    ref = _reference(x, w_fc, b_fc, w_proj, b_proj, act_dtype)
    assert out.shape == (B, T, n_embd)
    assert jnp.allclose(out, ref, atol=1e-2, rtol=1e-2)

    # 2) Streaming-weight path: tk=256 -> grid_k=2 (f32 accumulation across
    #    n_state chunks) with a ragged token count M=14 (partial edge row tile,
    #    no wrapper-side padding).
    x_odd = jax.random.normal(k_x, (2, 7, n_embd), dtype=jnp.float32)
    out_odd = jax.block_until_ready(
        mlp_forward(x_odd, w_fc, b_fc, w_proj, b_proj, tk=256))
    ref_odd = _reference(x_odd, w_fc, b_fc, w_proj, b_proj, act_dtype)
    assert out_odd.shape == (2, 7, n_embd)
    assert jnp.allclose(out_odd, ref_odd, atol=1e-2, rtol=1e-2)

    print("KERNEL_OK")
</pallas_src>

<mosaic_0001>
module attributes {stable_mosaic.version = 11 : i64} {
  func.func @_mlp_kernel(%arg0: i32, %arg1: i32, %arg2: memref<64x128xf32, #tpu.memory_space<vmem>>, %arg3: memref<128x512xbf16, #tpu.memory_space<vmem>>, %arg4: memref<1x512xf32, #tpu.memory_space<vmem>>, %arg5: memref<512x128xbf16, #tpu.memory_space<vmem>>, %arg6: memref<1x128xf32, #tpu.memory_space<vmem>>, %arg7: memref<64x128xf32, #tpu.memory_space<vmem>>, %arg8: memref<64x128xf32, #tpu.memory_space<vmem>>) attributes {dimension_semantics = [#tpu.dimension_semantics<parallel>, #tpu.dimension_semantics<arbitrary>], iteration_bounds = array<i64: 2, 1>, scalar_prefetch = 0 : i64, scratch_operands = 1 : i64, tpu.core_type = #tpu.core_type<tc>, window_params = [{transform_indices = @transform_0, window_bounds = array<i64: 64, 128>}, {pipeline_mode = #tpu.pipeline_mode<synchronous>, transform_indices = @transform_1, window_bounds = array<i64: 128, 512>}, {pipeline_mode = #tpu.pipeline_mode<synchronous>, transform_indices = @transform_2, window_bounds = array<i64: 1, 512>}, {pipeline_mode = #tpu.pipeline_mode<synchronous>, transform_indices = @transform_3, window_bounds = array<i64: 512, 128>}, {pipeline_mode = #tpu.pipeline_mode<synchronous>, transform_indices = @transform_4, window_bounds = array<i64: 1, 128>}, {transform_indices = @transform_5, window_bounds = array<i64: 64, 128>}]} {
    %c0_i32 = arith.constant 0 : i32
    %0 = arith.cmpi eq, %arg1, %c0_i32 : i32
    %1 = arith.extui %0 : i1 to i32
    %c0_i32_0 = arith.constant 0 : i32
    %2 = arith.cmpi ne, %1, %c0_i32_0 : i32
    scf.if %2 {
      %cst_19 = arith.constant 0.000000e+00 : f32
      %32 = vector.broadcast %cst_19 : f32 to vector<64x128xf32>
      %c0_20 = arith.constant 0 : index
      %c0_21 = arith.constant 0 : index
      %33 = vector.load %arg8[%c0_20, %c0_21] : memref<64x128xf32, #tpu.memory_space<vmem>>, vector<64x128xf32>
      tpu.vector_store %arg8[%c0_20, %c0_21], %32 {strides = array<i32>} : memref<64x128xf32, #tpu.memory_space<vmem>>, vector<64x128xf32>,
    } else {
    }
    %c0 = arith.constant 0 : index
    %c0_1 = arith.constant 0 : index
    %3 = vector.load %arg2[%c0, %c0_1] : memref<64x128xf32, #tpu.memory_space<vmem>>, vector<64x128xf32>
    %4 = arith.truncf %3 : vector<64x128xf32> to vector<64x128xbf16>
    %c0_2 = arith.constant 0 : index
    %c0_3 = arith.constant 0 : index
    %5 = vector.load %arg3[%c0_2, %c0_3] : memref<128x512xbf16, #tpu.memory_space<vmem>>, vector<128x512xbf16>
    %cst = arith.constant dense<0.000000e+00> : vector<64x512xf32>
    %6 = tpu.matmul %4, %5, %cst {dimension_numbers = #tpu.dot_dimension_numbers<[1], [0], [0], [1], [0, 0, 1, 1], [], []>} : vector<64x128xbf16>, vector<128x512xbf16>, vector<64x512xf32> -> vector<64x512xf32>
    %c0_4 = arith.constant 0 : index
    %c0_5 = arith.constant 0 : index
    %7 = vector.load %arg4[%c0_4, %c0_5] : memref<1x512xf32, #tpu.memory_space<vmem>>, vector<1x512xf32>
    %8 = vector.broadcast %7 : vector<1x512xf32> to vector<64x512xf32>
    %9 = arith.addf %6, %8 : vector<64x512xf32>
    %cst_6 = arith.constant 5.000000e-01 : f32
    %10 = vector.broadcast %cst_6 : f32 to vector<64x512xf32>
    %11 = arith.mulf %10, %9 : vector<64x512xf32>
    %cst_7 = arith.constant 4.471500e-02 : f32
    %12 = vector.broadcast %cst_7 : f32 to vector<64x512xf32>
    %13 = arith.mulf %12, %9 : vector<64x512xf32>
    %14 = arith.mulf %13, %9 : vector<64x512xf32>
    %15 = arith.mulf %14, %9 : vector<64x512xf32>
    %16 = arith.addf %9, %15 : vector<64x512xf32>
    %cst_8 = arith.constant 0.797884583 : f32
    %17 = vector.broadcast %cst_8 : f32 to vector<64x512xf32>
    %18 = arith.mulf %17, %16 : vector<64x512xf32>
    %19 = math.tanh %18 : vector<64x512xf32>
    %cst_9 = arith.constant 1.000000e+00 : f32
    %20 = vector.broadcast %cst_9 : f32 to vector<64x512xf32>
    %21 = arith.addf %20, %19 : vector<64x512xf32>
    %22 = arith.mulf %11, %21 : vector<64x512xf32>
    %c0_10 = arith.constant 0 : index
    %c0_11 = arith.constant 0 : index
    %23 = vector.load %arg8[%c0_10, %c0_11] : memref<64x128xf32, #tpu.memory_space<vmem>>, vector<64x128xf32>
    %24 = arith.truncf %22 : vector<64x512xf32> to vector<64x512xbf16>
    %c0_12 = arith.constant 0 : index
    %c0_13 = arith.constant 0 : index
    %25 = vector.load %arg5[%c0_12, %c0_13] : memref<512x128xbf16, #tpu.memory_space<vmem>>, vector<512x128xbf16>
    %cst_14 = arith.constant dense<0.000000e+00> : vector<64x128xf32>
    %26 = tpu.matmul %24, %25, %cst_14 {dimension_numbers = #tpu.dot_dimension_numbers<[1], [0], [0], [1], [0, 0, 1, 1], [], []>} : vector<64x512xbf16>, vector<512x128xbf16>, vector<64x128xf32> -> vector<64x128xf32>
    %27 = arith.addf %23, %26 : vector<64x128xf32>
    %c0_15 = arith.constant 0 : index
    %c0_16 = arith.constant 0 : index
    %28 = vector.load %arg8[%c0_15, %c0_16] : memref<64x128xf32, #tpu.memory_space<vmem>>, vector<64x128xf32>
    tpu.vector_store %arg8[%c0_15, %c0_16], %27 {strides = array<i32>} : memref<64x128xf32, #tpu.memory_space<vmem>>, vector<64x128xf32>,
    %c0_i32_17 = arith.constant 0 : i32
    %29 = arith.cmpi eq, %arg1, %c0_i32_17 : i32
    %30 = arith.extui %29 : i1 to i32
    %c0_i32_18 = arith.constant 0 : i32
    %31 = arith.cmpi ne, %30, %c0_i32_18 : i32
    scf.if %31 {
      %c0_19 = arith.constant 0 : index
      %c0_20 = arith.constant 0 : index
      %32 = vector.load %arg8[%c0_19, %c0_20] : memref<64x128xf32, #tpu.memory_space<vmem>>, vector<64x128xf32>
      %c0_21 = arith.constant 0 : index
      %c0_22 = arith.constant 0 : index
      %33 = vector.load %arg6[%c0_21, %c0_22] : memref<1x128xf32, #tpu.memory_space<vmem>>, vector<1x128xf32>
      %34 = vector.broadcast %33 : vector<1x128xf32> to vector<64x128xf32>
      %35 = arith.addf %32, %34 : vector<64x128xf32>
      %c0_23 = arith.constant 0 : index
      %c0_24 = arith.constant 0 : index
      %36 = vector.load %arg7[%c0_23, %c0_24] : memref<64x128xf32, #tpu.memory_space<vmem>>, vector<64x128xf32>
      tpu.vector_store %arg7[%c0_23, %c0_24], %35 {strides = array<i32>} : memref<64x128xf32, #tpu.memory_space<vmem>>, vector<64x128xf32>,
    } else {
    }
    return
  }
  func.func @transform_0(%arg0: i32, %arg1: i32) -> (i32, i32) {
    %c0_i32 = arith.constant 0 : i32
    %c0_i32_0 = arith.constant 0 : i32
    return %arg0, %c0_i32 : i32, i32
  }
  func.func @transform_1(%arg0: i32, %arg1: i32) -> (i32, i32) {
    %c0_i32 = arith.constant 0 : i32
    %c0_i32_0 = arith.constant 0 : i32
    return %c0_i32, %arg1 : i32, i32
  }
  func.func @transform_2(%arg0: i32, %arg1: i32) -> (i32, i32) {
    %c0_i32 = arith.constant 0 : i32
    %c0_i32_0 = arith.constant 0 : i32
    return %c0_i32, %arg1 : i32, i32
  }
  func.func @transform_3(%arg0: i32, %arg1: i32) -> (i32, i32) {
    %c0_i32 = arith.constant 0 : i32
    %c0_i32_0 = arith.constant 0 : i32
    return %arg1, %c0_i32 : i32, i32
  }
  func.func @transform_4(%arg0: i32, %arg1: i32) -> (i32, i32) {
    %c0_i32 = arith.constant 0 : i32
    %c0_i32_0 = arith.constant 0 : i32
    %c0_i32_1 = arith.constant 0 : i32
    return %c0_i32, %c0_i32_0 : i32, i32
  }
  func.func @transform_5(%arg0: i32, %arg1: i32) -> (i32, i32) {
    %c0_i32 = arith.constant 0 : i32
    %c0_i32_0 = arith.constant 0 : i32
    return %arg0, %c0_i32 : i32, i32
  }
}

module attributes {stable_mosaic.version = 11 : i64} {
  func.func @_mlp_kernel(%arg0: i32, %arg1: i32, %arg2: memref<64x128xf32, #tpu.memory_space<vmem>>, %arg3: memref<128x512xbf16, #tpu.memory_space<vmem>>, %arg4: memref<1x512xf32, #tpu.memory_space<vmem>>, %arg5: memref<512x128xbf16, #tpu.memory_space<vmem>>, %arg6: memref<1x128xf32, #tpu.memory_space<vmem>>, %arg7: memref<64x128xf32, #tpu.memory_space<vmem>>, %arg8: memref<64x128xf32, #tpu.memory_space<vmem>>) attributes {dimension_semantics = [#tpu.dimension_semantics<parallel>, #tpu.dimension_semantics<arbitrary>], iteration_bounds = array<i64: 2, 1>, scalar_prefetch = 0 : i64, scratch_operands = 1 : i64, tpu.core_type = #tpu.core_type<tc>, window_params = [{transform_indices = @transform_0, window_bounds = array<i64: 64, 128>}, {transform_indices = @transform_1, window_bounds = array<i64: 128, 512>}, {transform_indices = @transform_2, window_bounds = array<i64: 1, 512>}, {transform_indices = @transform_3, window_bounds = array<i64: 512, 128>}, {pipeline_mode = #tpu.pipeline_mode<synchronous>, transform_indices = @transform_4, window_bounds = array<i64: 1, 128>}, {transform_indices = @transform_5, window_bounds = array<i64: 64, 128>}]} {
    %c0_i32 = arith.constant 0 : i32
    %0 = arith.cmpi eq, %arg1, %c0_i32 : i32
    %1 = arith.extui %0 : i1 to i32
    %c0_i32_0 = arith.constant 0 : i32
    %2 = arith.cmpi ne, %1, %c0_i32_0 : i32
    scf.if %2 {
      %cst_19 = arith.constant 0.000000e+00 : f32
      %32 = vector.broadcast %cst_19 : f32 to vector<64x128xf32>
      %c0_20 = arith.constant 0 : index
      %c0_21 = arith.constant 0 : index
      %33 = vector.load %arg8[%c0_20, %c0_21] : memref<64x128xf32, #tpu.memory_space<vmem>>, vector<64x128xf32>
      tpu.vector_store %arg8[%c0_20, %c0_21], %32 {strides = array<i32>} : memref<64x128xf32, #tpu.memory_space<vmem>>, vector<64x128xf32>,
    } else {
    }
    %c0 = arith.constant 0 : index
    %c0_1 = arith.constant 0 : index
    %3 = vector.load %arg2[%c0, %c0_1] : memref<64x128xf32, #tpu.memory_space<vmem>>, vector<64x128xf32>
    %4 = arith.truncf %3 : vector<64x128xf32> to vector<64x128xbf16>
    %c0_2 = arith.constant 0 : index
    %c0_3 = arith.constant 0 : index
    %5 = vector.load %arg3[%c0_2, %c0_3] : memref<128x512xbf16, #tpu.memory_space<vmem>>, vector<128x512xbf16>
    %cst = arith.constant dense<0.000000e+00> : vector<64x512xf32>
    %6 = tpu.matmul %4, %5, %cst {dimension_numbers = #tpu.dot_dimension_numbers<[1], [0], [0], [1], [0, 0, 1, 1], [], []>} : vector<64x128xbf16>, vector<128x512xbf16>, vector<64x512xf32> -> vector<64x512xf32>
    %c0_4 = arith.constant 0 : index
    %c0_5 = arith.constant 0 : index
    %7 = vector.load %arg4[%c0_4, %c0_5] : memref<1x512xf32, #tpu.memory_space<vmem>>, vector<1x512xf32>
    %8 = vector.broadcast %7 : vector<1x512xf32> to vector<64x512xf32>
    %9 = arith.addf %6, %8 : vector<64x512xf32>
    %cst_6 = arith.constant 5.000000e-01 : f32
    %10 = vector.broadcast %cst_6 : f32 to vector<64x512xf32>
    %11 = arith.mulf %10, %9 : vector<64x512xf32>
    %cst_7 = arith.constant 4.471500e-02 : f32
    %12 = vector.broadcast %cst_7 : f32 to vector<64x512xf32>
    %13 = arith.mulf %12, %9 : vector<64x512xf32>
    %14 = arith.mulf %13, %9 : vector<64x512xf32>
    %15 = arith.mulf %14, %9 : vector<64x512xf32>
    %16 = arith.addf %9, %15 : vector<64x512xf32>
    %cst_8 = arith.constant 0.797884583 : f32
    %17 = vector.broadcast %cst_8 : f32 to vector<64x512xf32>
    %18 = arith.mulf %17, %16 : vector<64x512xf32>
    %19 = math.tanh %18 : vector<64x512xf32>
    %cst_9 = arith.constant 1.000000e+00 : f32
    %20 = vector.broadcast %cst_9 : f32 to vector<64x512xf32>
    %21 = arith.addf %20, %19 : vector<64x512xf32>
    %22 = arith.mulf %11, %21 : vector<64x512xf32>
    %c0_10 = arith.constant 0 : index
    %c0_11 = arith.constant 0 : index
    %23 = vector.load %arg8[%c0_10, %c0_11] : memref<64x128xf32, #tpu.memory_space<vmem>>, vector<64x128xf32>
    %24 = arith.truncf %22 : vector<64x512xf32> to vector<64x512xbf16>
    %c0_12 = arith.constant 0 : index
    %c0_13 = arith.constant 0 : index
    %25 = vector.load %arg5[%c0_12, %c0_13] : memref<512x128xbf16, #tpu.memory_space<vmem>>, vector<512x128xbf16>
    %cst_14 = arith.constant dense<0.000000e+00> : vector<64x128xf32>
    %26 = tpu.matmul %24, %25, %cst_14 {dimension_numbers = #tpu.dot_dimension_numbers<[1], [0], [0], [1], [0, 0, 1, 1], [], []>} : vector<64x512xbf16>, vector<512x128xbf16>, vector<64x128xf32> -> vector<64x128xf32>
    %27 = arith.addf %23, %26 : vector<64x128xf32>
    %c0_15 = arith.constant 0 : index
    %c0_16 = arith.constant 0 : index
    %28 = vector.load %arg8[%c0_15, %c0_16] : memref<64x128xf32, #tpu.memory_space<vmem>>, vector<64x128xf32>
    tpu.vector_store %arg8[%c0_15, %c0_16], %27 {strides = array<i32>} : memref<64x128xf32, #tpu.memory_space<vmem>>, vector<64x128xf32>,
    %c0_i32_17 = arith.constant 0 : i32
    %29 = arith.cmpi eq, %arg1, %c0_i32_17 : i32
    %30 = arith.extui %29 : i1 to i32
    %c0_i32_18 = arith.constant 0 : i32
    %31 = arith.cmpi ne, %30, %c0_i32_18 : i32
    scf.if %31 {
      %c0_19 = arith.constant 0 : index
      %c0_20 = arith.constant 0 : index
      %32 = vector.load %arg8[%c0_19, %c0_20] : memref<64x128xf32, #tpu.memory_space<vmem>>, vector<64x128xf32>
      %c0_21 = arith.constant 0 : index
      %c0_22 = arith.constant 0 : index
      %33 = vector.load %arg6[%c0_21, %c0_22] : memref<1x128xf32, #tpu.memory_space<vmem>>, vector<1x128xf32>
      %34 = vector.broadcast %33 : vector<1x128xf32> to vector<64x128xf32>
      %35 = arith.addf %32, %34 : vector<64x128xf32>
      %c0_23 = arith.constant 0 : index
      %c0_24 = arith.constant 0 : index
      %36 = vector.load %arg7[%c0_23, %c0_24] : memref<64x128xf32, #tpu.memory_space<vmem>>, vector<64x128xf32>
      tpu.vector_store %arg7[%c0_23, %c0_24], %35 {strides = array<i32>} : memref<64x128xf32, #tpu.memory_space<vmem>>, vector<64x128xf32>,
    } else {
    }
    return
  }
  func.func @transform_0(%arg0: i32, %arg1: i32) -> (i32, i32) {
    %c0_i32 = arith.constant 0 : i32
    %c0_i32_0 = arith.constant 0 : i32
    return %arg0, %c0_i32 : i32, i32
  }
  func.func @transform_1(%arg0: i32, %arg1: i32) -> (i32, i32) {
    %c0_i32 = arith.constant 0 : i32
    %c0_i32_0 = arith.constant 0 : i32
    return %c0_i32, %arg1 : i32, i32
  }
  func.func @transform_2(%arg0: i32, %arg1: i32) -> (i32, i32) {
    %c0_i32 = arith.constant 0 : i32
    %c0_i32_0 = arith.constant 0 : i32
    return %c0_i32, %arg1 : i32, i32
  }
  func.func @transform_3(%arg0: i32, %arg1: i32) -> (i32, i32) {
    %c0_i32 = arith.constant 0 : i32
    %c0_i32_0 = arith.constant 0 : i32
    return %arg1, %c0_i32 : i32, i32
  }
  func.func @transform_4(%arg0: i32, %arg1: i32) -> (i32, i32) {
    %c0_i32 = arith.constant 0 : i32
    %c0_i32_0 = arith.constant 0 : i32
    %c0_i32_1 = arith.constant 0 : i32
    return %c0_i32, %c0_i32_0 : i32, i32
  }
  func.func @transform_5(%arg0: i32, %arg1: i32) -> (i32, i32) {
    %c0_i32 = arith.constant 0 : i32
    %c0_i32_0 = arith.constant 0 : i32
    return %arg0, %c0_i32 : i32, i32
  }
}

</mosaic_0001>

<llo_original>
// kernel: tpu_custom_call.1
$region0: #{tpu_custom_call.1}
  #allocation0 [shape = 'u32[]', space=smem, size = 0x4, offset = 0x4, fixed_abs, tag = 'smem constant byte address 0x4 - core index']
  #allocation1 [shape = 'u32[144,128]{1,0:T(1,128)}', space=vmem, size = 0x12000, scoped, tag = 'internal scratch']
  #allocation2 [shape = 'f32[64,128]{1,0:T(8,128)}', space=vmem, size = 0x8000, scoped, tag = 'scratch operand']
  %s0 = inlined_call_operand.hbm [shape: f32[128,128], index: 0, kind: input, shape index: {}]
  %s1 = inlined_call_operand.hbm [shape: bf16[128,512], index: 1, kind: input, shape index: {}]
  %s2 = inlined_call_operand.vmem [shape: f32[1,512], index: 2, kind: input, shape index: {}]
  %s3 = inlined_call_operand.hbm [shape: bf16[512,128], index: 3, kind: input, shape index: {}]
  %s4 = inlined_call_operand.vmem [shape: f32[1,128], index: 4, kind: input, shape index: {}]
  %s5 = inlined_call_operand.hbm [shape: f32[128,128], index: 5, kind: output, shape index: {}]
  %s6 = sld [smem:[#allocation0]]
  $region73: #{tpu_custom_call.1} parent=0
    _
  %s8 = ssub.s32 1, %s6
  %s9 = scalar_select 0, %s8, %s6
  $region1: #{tpu_custom_call.1} parent=0
    #allocation3 [shape = 'u8[65536]{0}', space=vmem, size = 0x10000, scoped, tag = 'input window, operand 0']
    #allocation4 [shape = 's32[2]{0}', space=sflag, size = 0x8, scoped, tag = 'scoped memory for tpu_custom_call.1']
    #allocation5 [shape = 's32[2]{0}', space=sflag, size = 0x8, scoped, tag = 'scoped memory for tpu_custom_call.1']
    #allocation6 [shape = 'u8[131072]{0}', space=vmem, size = 0x20000, scoped, tag = 'input window, operand 1, single buffered']
    #allocation7 [shape = 's32[1]{0}', space=sflag, size = 0x4, scoped, tag = 'scoped memory for tpu_custom_call.1']
    #allocation8 [shape = 'u8[131072]{0}', space=vmem, size = 0x20000, scoped, tag = 'input window, operand 3, single buffered']
    #allocation9 [shape = 'u8[65536]{0}', space=vmem, size = 0x10000, scoped, tag = 'output window, operand 0']
    %10 = vsyncpa [#allocation4], 0
    %s11 = scalar_lea.sflag [#allocation4], 1
    %12 = vsyncpa %s11, 0
    %13 = vsyncpa [#allocation7], 0
    %14 = vsyncpa [#allocation5], 0
    %s15 = scalar_lea.sflag [#allocation5], 1
    %16 = vsyncpa %s15, 0
    loop: start=0, step=1, limit=4
    $region2: #{tpu_custom_call.1} parent=1 // loop_pre_header
      _
    $region3: #{tpu_custom_call.1} parent=1 // loop_header
      %s18 = sphi 0, %s22
      %p19 = scmp.ge.s32.totalorder %s18, 4
      %s25 = sphi 0, %s37
      %s26 = sphi 0, %s33
      %s27 = sphi 0, %s25
      %s28 = sphi 0, %s26
      %s29 = sphi 0, %s27
      %s30 = sphi 0, %s28
      %s40 = sphi 0, %s42
      %s43 = sphi 0, %s40
      %s44 = sphi 0, %s43
      %s60 = sphi 0, %s44
      %s66 = sphi 0, %s68
      %s69 = sphi 0, %s66
      %s70 = sphi 0, %s69
      %s86 = sphi 0, %s70
      %s92 = sphi 0, %s94
      %s95 = sphi 0, %s92
      %s96 = sphi 0, %s95
      %s112 = sphi 0, %s96
      %s118 = sphi 0, %s120
      %s121 = sphi 0, %s118
      %s122 = sphi 0, %s121
      %s138 = sphi 0, %s122
      %s142 = sphi 0, %s142
      %s144 = sphi 0, %s142
      %s145 = sphi 0, %s144
      %s159 = sphi 0, %s145
      %s165 = sphi 0, %s167
      %s168 = sphi 0, %s165
      %s169 = sphi 0, %s168
      %s185 = sphi 0, %s169
    $region4: #{tpu_custom_call.1} parent=1 // loop_header_branch
      %21 = sbr.rel (%p19) target = $region8
    $region5: #{tpu_custom_call.1} parent=1 // loop_body
      %s23 = ssub.s32 %s18, 1
      %s24 = ssub.s32 %s18, 2
      %s31 = sadd.s32 1, %s26
      %p32 = scmp.ge.s32.totalorder %s31, 1
      %s33 = scalar_select %p32, 0, %s31
      %s34 = sadd.s32 1, %s25
      %s35 = scalar_select %p32, %s34, %s25
      %p36 = scmp.ge.s32.totalorder %s35, 2
      %s37 = scalar_select %p36, 0, %s35
      %s38 = ssub.s32 %s25, %s37
      %p39 = scmp.eq.s32.totalorder %s38, 0
      %s41 = sadd.s32 %s40, 1
      %s42 = scalar_select %p39, %s40, %s41
      %p45 = pneg %p39
      %p46 = scmp.eq.s32.totalorder %s18, 1
      %p47 = por %p45, %p46
      %p48 = scmp.ne.s32.totalorder %s40, %s43
      %p49 = scmp.eq.s32.totalorder %s18, 0
      %p50 = por %p48, %p49
      %p51 = scmp.ne.s32.totalorder %s40, %s43
      %p52 = scmp.eq.s32.totalorder %s23, 1
      %p53 = por %p51, %p52
      %p54 = scmp.ne.s32.totalorder %s43, %s44
      %p55 = scmp.eq.s32.totalorder %s23, 0
      %p56 = por %p54, %p55
      %p57 = scmp.ne.s32.totalorder %s43, %s44
      %p58 = scmp.eq.s32.totalorder %s24, 1
      %p59 = por %p57, %p58
      %p61 = scmp.ne.s32.totalorder %s44, %s60
      %p62 = scmp.eq.s32.totalorder %s24, 0
      %p63 = por %p61, %p62
      %s64 = ssub.s32 %s26, %s33
      %p65 = scmp.eq.s32.totalorder %s64, 0
      %s67 = sadd.s32 %s66, 1
      %s68 = scalar_select %p65, %s66, %s67
      %p71 = pneg %p65
      %p72 = scmp.eq.s32.totalorder %s18, 1
      %p73 = por %p71, %p72
      %p74 = scmp.ne.s32.totalorder %s66, %s69
      %p75 = scmp.eq.s32.totalorder %s18, 0
      %p76 = por %p74, %p75
      %p77 = scmp.ne.s32.totalorder %s66, %s69
      %p78 = scmp.eq.s32.totalorder %s23, 1
      %p79 = por %p77, %p78
      %p80 = scmp.ne.s32.totalorder %s69, %s70
      %p81 = scmp.eq.s32.totalorder %s23, 0
      %p82 = por %p80, %p81
      %p83 = scmp.ne.s32.totalorder %s69, %s70
      %p84 = scmp.eq.s32.totalorder %s24, 1
      %p85 = por %p83, %p84
      %p87 = scmp.ne.s32.totalorder %s70, %s86
      %p88 = scmp.eq.s32.totalorder %s24, 0
      %p89 = por %p87, %p88
      %s90 = ssub.s32 %s26, %s33
      %p91 = scmp.eq.s32.totalorder %s90, 0
      %s93 = sadd.s32 %s92, 1
      %s94 = scalar_select %p91, %s92, %s93
      %p97 = pneg %p91
      %p98 = scmp.eq.s32.totalorder %s18, 1
      %p99 = por %p97, %p98
      %p100 = scmp.ne.s32.totalorder %s92, %s95
      %p101 = scmp.eq.s32.totalorder %s18, 0
      %p102 = por %p100, %p101
      %p103 = scmp.ne.s32.totalorder %s92, %s95
      %p104 = scmp.eq.s32.totalorder %s23, 1
      %p105 = por %p103, %p104
      %p106 = scmp.ne.s32.totalorder %s95, %s96
      %p107 = scmp.eq.s32.totalorder %s23, 0
      %p108 = por %p106, %p107
      %p109 = scmp.ne.s32.totalorder %s95, %s96
      %p110 = scmp.eq.s32.totalorder %s24, 1
      %p111 = por %p109, %p110
      %p113 = scmp.ne.s32.totalorder %s96, %s112
      %p114 = scmp.eq.s32.totalorder %s24, 0
      %p115 = por %p113, %p114
      %s116 = ssub.s32 %s26, %s33
      %p117 = scmp.eq.s32.totalorder %s116, 0
      %s119 = sadd.s32 %s118, 1
      %s120 = scalar_select %p117, %s118, %s119
      %p123 = pneg %p117
      %p124 = scmp.eq.s32.totalorder %s18, 1
      %p125 = por %p123, %p124
      %p126 = scmp.ne.s32.totalorder %s118, %s121
      %p127 = scmp.eq.s32.totalorder %s18, 0
      %p128 = por %p126, %p127
      %p129 = scmp.ne.s32.totalorder %s118, %s121
      %p130 = scmp.eq.s32.totalorder %s23, 1
      %p131 = por %p129, %p130
      %p132 = scmp.ne.s32.totalorder %s121, %s122
      %p133 = scmp.eq.s32.totalorder %s23, 0
      %p134 = por %p132, %p133
      %p135 = scmp.ne.s32.totalorder %s121, %s122
      %p136 = scmp.eq.s32.totalorder %s24, 1
      %p137 = por %p135, %p136
      %p139 = scmp.ne.s32.totalorder %s122, %s138
      %p140 = scmp.eq.s32.totalorder %s24, 0
      %p141 = por %p139, %p140
      %s143 = sadd.s32 %s142, 1
      %p146 = scmp.eq.s32.totalorder %s18, 1
      %p147 = scmp.ne.s32.totalorder %s142, %s144
      %p148 = scmp.eq.s32.totalorder %s18, 0
      %p149 = por %p147, %p148
      %p150 = scmp.ne.s32.totalorder %s142, %s144
      %p151 = scmp.eq.s32.totalorder %s23, 1
      %p152 = por %p150, %p151
      %p153 = scmp.ne.s32.totalorder %s144, %s145
      %p154 = scmp.eq.s32.totalorder %s23, 0
      %p155 = por %p153, %p154
      %p156 = scmp.ne.s32.totalorder %s144, %s145
      %p157 = scmp.eq.s32.totalorder %s24, 1
      %p158 = por %p156, %p157
      %p160 = scmp.ne.s32.totalorder %s145, %s159
      %p161 = scmp.eq.s32.totalorder %s24, 0
      %p162 = por %p160, %p161
      %s163 = ssub.s32 %s25, %s37
      %p164 = scmp.eq.s32.totalorder %s163, 0
      %s166 = sadd.s32 %s165, 1
      %s167 = scalar_select %p164, %s165, %s166
      %p170 = pneg %p164
      %p171 = scmp.eq.s32.totalorder %s18, 1
      %p172 = por %p170, %p171
      %p173 = scmp.ne.s32.totalorder %s165, %s168
      %p174 = scmp.eq.s32.totalorder %s18, 0
      %p175 = por %p173, %p174
      %p176 = scmp.ne.s32.totalorder %s165, %s168
      %p177 = scmp.eq.s32.totalorder %s23, 1
      %p178 = por %p176, %p177
      %p179 = scmp.ne.s32.totalorder %s168, %s169
      %p180 = scmp.eq.s32.totalorder %s23, 0
      %p181 = por %p179, %p180
      %p182 = scmp.ne.s32.totalorder %s168, %s169
      %p183 = scmp.eq.s32.totalorder %s24, 1
      %p184 = por %p182, %p183
      %p186 = scmp.ne.s32.totalorder %s169, %s185
      %p187 = scmp.eq.s32.totalorder %s24, 0
      %p188 = por %p186, %p187
      %p189 = scmp.le.s32.totalorder 1, %s18
      %p190 = scmp.lt.s32.totalorder %s18, 3
      %p191 = pnand %p189, %p190
      %p192 = pneg %p191
      // Predicated region
      $region9: #{tpu_custom_call.1} parent=5 // pred_check
        _
      $region10: #{tpu_custom_call.1} parent=5 // pred_check_branch
        %194 = sbr.rel (%p191) target = $region12
      $region11: #{tpu_custom_call.1} parent=5 // pred_region
        %s195 = ssub.s32 %s18, 1
        // Predicated region
        $region13: #{tpu_custom_call.1} parent=11 // pred_check
          %p196 = pneg %p82
        $region14: #{tpu_custom_call.1} parent=11 // pred_check_branch
          %198 = sbr.rel (%p196) target = $region16
        $region15: #{tpu_custom_call.1} parent=11 // pred_region
          %s199 = smul.u32 4, %s28
          %s201 = ssub.s32 4096, 4096
          %202 = vsyncadd [#allocation7], %s201
          %s203 = smul.addr %s199, 64
          %s204 = scalar_lea.hbm %s1, %s203
          %s205 = sshll.u32 [#allocation6], 4
          %s206 = int_to_ptr.vmem [resolvable:$true] %s205
          %211 = dma.hbm_to_vmem [thread:$0]  %s204, 4096, %s206, [#allocation7], 256, 256, 16
        $region16: #{tpu_custom_call.1} parent=11 // pred_fallthru
          _
        // Predicated region
        $region17: #{tpu_custom_call.1} parent=11 // pred_check
          %p212 = pneg %p108
        $region18: #{tpu_custom_call.1} parent=11 // pred_check_branch
          %214 = sbr.rel (%p212) target = $region20
        $region19: #{tpu_custom_call.1} parent=11 // pred_region
          %s215 = smul.u32 4, %s28
          %p216 = scmp.lt.s32.totalorder %s215, 3
          %s217 = scalar_select %p216, %s215, 3
          %s218 = scalar_lea.vmem %s2, %s217
          %s219 = smul.u32 4, %s28
        $region20: #{tpu_custom_call.1} parent=11 // pred_fallthru
          _
        // Predicated region
        $region21: #{tpu_custom_call.1} parent=11 // pred_check
          %p220 = pneg %p134
        $region22: #{tpu_custom_call.1} parent=11 // pred_check_branch
          %222 = sbr.rel (%p220) target = $region24
        $region23: #{tpu_custom_call.1} parent=11 // pred_region
          %s223 = smul.u32 64, %s28
          %s225 = ssub.s32 4096, 4096
          %226 = vsyncadd [#allocation7], %s225
          %s227 = smul.addr %s223, 64
          %s228 = scalar_lea.hbm %s3, %s227
          %s229 = sshll.u32 [#allocation8], 4
          %s230 = int_to_ptr.vmem [resolvable:$true] %s229
          %235 = dma.hbm_to_vmem [thread:$0]  %s228, 4096, %s230, [#allocation7], 64, 64, 4
        $region24: #{tpu_custom_call.1} parent=11 // pred_fallthru
          _
        // Predicated region
        $region25: #{tpu_custom_call.1} parent=11 // pred_check
          %p236 = pneg %p155
        $region26: #{tpu_custom_call.1} parent=11 // pred_check_branch
          %238 = sbr.rel (%p236) target = $region28
        $region27: #{tpu_custom_call.1} parent=11 // pred_region
          _
        $region28: #{tpu_custom_call.1} parent=11 // pred_fallthru
          _
      $region12: #{tpu_custom_call.1} parent=5 // pred_fallthru
        _
      %p239 = scmp.lt.s32.totalorder %s18, 2
      // Predicated region
      $region29: #{tpu_custom_call.1} parent=5 // pred_check
        %p240 = pneg %p239
      $region30: #{tpu_custom_call.1} parent=5 // pred_check_branch
        %242 = sbr.rel (%p240) target = $region32
      $region31: #{tpu_custom_call.1} parent=5 // pred_region
        // Predicated region
        $region33: #{tpu_custom_call.1} parent=31 // pred_check
          %p243 = pneg %p50
        $region34: #{tpu_custom_call.1} parent=31 // pred_check_branch
          %245 = sbr.rel (%p243) target = $region36
        $region35: #{tpu_custom_call.1} parent=31 // pred_region
          %s246 = sand.u32 %s40, 1
          %s247 = scalar_lea.sflag [#allocation4], %s246
          %s248 = sand.u32 %s40, 1
          %s249 = smul.addr %s248, 64
          %s250 = scalar_lea.vmem [#allocation3], %s249
          %s251 = smul.u32 8, %s25
          %s253 = ssub.s32 1024, 1024
          %254 = vsyncadd %s247, %s253
          %s255 = smul.addr %s251, 128
          %s256 = scalar_lea.hbm %s0, %s255
          %s257 = sshll.u32 %s250, 4
          %s258 = int_to_ptr.vmem [resolvable:$true] %s257
          %263 = dma.hbm_to_vmem [thread:$0]  %s256, 1024, %s258, %s247, 128, 128, 8
        $region36: #{tpu_custom_call.1} parent=31 // pred_fallthru
          _
      $region32: #{tpu_custom_call.1} parent=5 // pred_fallthru
        _
      %p264 = scmp.le.s32.totalorder 1, %s18
      %p265 = scmp.lt.s32.totalorder %s18, 3
      %p266 = pnand %p264, %p265
      %p267 = pneg %p266
      // Predicated region
      $region37: #{tpu_custom_call.1} parent=5 // pred_check
        _
      $region38: #{tpu_custom_call.1} parent=5 // pred_check_branch
        %269 = sbr.rel (%p266) target = $region40
      $region39: #{tpu_custom_call.1} parent=5 // pred_region
        %s270 = ssub.s32 %s18, 1
        %s271 = sand.u32 %s43, 1
        %s272 = scalar_lea.sflag [#allocation4], %s271
        %s273 = sand.u32 %s43, 1
        %s274 = smul.addr %s273, 64
        %s275 = scalar_lea.vmem [#allocation3], %s274
        // Predicated region
        $region41: #{tpu_custom_call.1} parent=39 // pred_check
          %p276 = pneg %p56
        $region42: #{tpu_custom_call.1} parent=39 // pred_check_branch
          %278 = sbr.rel (%p276) target = $region44
        $region43: #{tpu_custom_call.1} parent=39 // pred_region
          %279 = dma.done %s272, 1024
        $region44: #{tpu_custom_call.1} parent=39 // pred_fallthru
          _
        // Predicated region
        $region45: #{tpu_custom_call.1} parent=39 // pred_check
          %p280 = pneg %p82
        $region46: #{tpu_custom_call.1} parent=39 // pred_check_branch
          %282 = sbr.rel (%p280) target = $region48
        $region47: #{tpu_custom_call.1} parent=39 // pred_region
          %283 = dma.done [#allocation7], 4096
        $region48: #{tpu_custom_call.1} parent=39 // pred_fallthru
          _
        // Predicated region
        $region49: #{tpu_custom_call.1} parent=39 // pred_check
          %p284 = pneg %p134
        $region50: #{tpu_custom_call.1} parent=39 // pred_check_branch
          %286 = sbr.rel (%p284) target = $region52
        $region51: #{tpu_custom_call.1} parent=39 // pred_region
          %287 = dma.done [#allocation7], 4096
        $region52: #{tpu_custom_call.1} parent=39 // pred_fallthru
          _
        %s288 = sand.u32 %s43, 1
        %s289 = scalar_lea.sflag [#allocation4], %s288
        %s290 = sand.u32 %s43, 1
        %s291 = smul.addr %s290, 64
        %s292 = scalar_lea.vmem [#allocation3], %s291
        %p293 = pneg %p56
        %p294 = pneg %p53
        %p295 = pneg %p82
        %p296 = pneg %p79
        %s297 = smul.u32 4, %s28
        %p298 = scmp.lt.s32.totalorder %s297, 3
        %s299 = scalar_select %p298, %s297, 3
        %s300 = scalar_lea.vmem %s2, %s299
        %p301 = pneg %p108
        %p302 = pneg %p105
        %p303 = pneg %p134
        %p304 = pneg %p131
        %p305 = pneg %p155
        %p306 = pneg %p152
        %p307 = pneg %p181
        %p308 = pneg %p178
        %s309 = sand.u32 %s168, 1
        %s310 = scalar_lea.sflag [#allocation5], %s309
        %s311 = sand.u32 %s168, 1
        %s312 = smul.addr %s311, 64
        %s313 = scalar_lea.vmem [#allocation9], %s312
        %s314 = smul.u32 8, %s27
        %s315 = smul.u32 4, %s28
        %s316 = smul.u32 4, %s28
        %p317 = scmp.lt.s32.totalorder %s316, 3
        %s318 = scalar_select %p317, %s316, 3
        %s319 = scalar_lea.vmem %s2, %s318
        %s320 = smul.u32 4, %s28
        %s321 = smul.u32 64, %s28
        %s322 = smul.u32 8, %s27
        %p324 = scmp.eq.s32.totalorder %s28, 0
        // Predicated region
        $region53: #{tpu_custom_call.1} parent=39 // pred_check
          %p325 = pneg %p324
        $region54: #{tpu_custom_call.1} parent=39 // pred_check_branch
          %327 = sbr.rel (%p325) target = $region56
        $region55: #{tpu_custom_call.1} parent=39 // pred_region
          %328 = vst [vmem:[#allocation2] sm:$0xff] 0.0
          %329 = vst [vmem:[#allocation2 + $0x8] sm:$0xff] 0.0
          %330 = vst [vmem:[#allocation2 + $0x10] sm:$0xff] 0.0
          %331 = vst [vmem:[#allocation2 + $0x18] sm:$0xff] 0.0
          %332 = vst [vmem:[#allocation2 + $0x20] sm:$0xff] 0.0
          %333 = vst [vmem:[#allocation2 + $0x28] sm:$0xff] 0.0
          %334 = vst [vmem:[#allocation2 + $0x30] sm:$0xff] 0.0
          %335 = vst [vmem:[#allocation2 + $0x38] sm:$0xff] 0.0
        $region56: #{tpu_custom_call.1} parent=39 // pred_fallthru
          _
        %v336 = vld [vmem:[%s275] sm:$0xff]
        %v337 = vld [vmem:[%s275 + $0x8] sm:$0xff]
        %v338 = vld [vmem:[%s275 + $0x10] sm:$0xff]
        %v339 = vld [vmem:[%s275 + $0x18] sm:$0xff]
        %v340 = vld [vmem:[%s275 + $0x20] sm:$0xff]
        %v341 = vld [vmem:[%s275 + $0x28] sm:$0xff]
        %v342 = vld [vmem:[%s275 + $0x30] sm:$0xff]
        %v343 = vld [vmem:[%s275 + $0x38] sm:$0xff]
        %v344 = vpack.c.bf16 %v337, %v336
        %v345 = vpack.c.bf16 %v339, %v338
        %v346 = vpack.c.bf16 %v341, %v340
        %v347 = vpack.c.bf16 %v343, %v342
        %v348 = vld [vmem:[#allocation6] sm:$0xff]
        %v349 = vld [vmem:[#allocation6 + $0x8] sm:$0xff]
        %v350 = vld [vmem:[#allocation6 + $0x10] sm:$0xff]
        %v351 = vld [vmem:[#allocation6 + $0x18] sm:$0xff]
        %v352 = vld [vmem:[#allocation6 + $0x20] sm:$0xff]
        %v353 = vld [vmem:[#allocation6 + $0x28] sm:$0xff]
        %v354 = vld [vmem:[#allocation6 + $0x30] sm:$0xff]
        %v355 = vld [vmem:[#allocation6 + $0x38] sm:$0xff]
        %v356 = vld [vmem:[#allocation6 + $0x40] sm:$0xff]
        %v357 = vld [vmem:[#allocation6 + $0x48] sm:$0xff]
        %v358 = vld [vmem:[#allocation6 + $0x50] sm:$0xff]
        %v359 = vld [vmem:[#allocation6 + $0x58] sm:$0xff]
        %v360 = vld [vmem:[#allocation6 + $0x60] sm:$0xff]
        %v361 = vld [vmem:[#allocation6 + $0x68] sm:$0xff]
        %v362 = vld [vmem:[#allocation6 + $0x70] sm:$0xff]
        %v363 = vld [vmem:[#allocation6 + $0x78] sm:$0xff]
        %v364 = vld [vmem:[#allocation6 + $0x80] sm:$0xff]
        %v365 = vld [vmem:[#allocation6 + $0x88] sm:$0xff]
        %v366 = vld [vmem:[#allocation6 + $0x90] sm:$0xff]
        %v367 = vld [vmem:[#allocation6 + $0x98] sm:$0xff]
        %v368 = vld [vmem:[#allocation6 + $0xa0] sm:$0xff]
        %v369 = vld [vmem:[#allocation6 + $0xa8] sm:$0xff]
        %v370 = vld [vmem:[#allocation6 + $0xb0] sm:$0xff]
        %v371 = vld [vmem:[#allocation6 + $0xb8] sm:$0xff]
        %v372 = vld [vmem:[#allocation6 + $0xc0] sm:$0xff]
        %v373 = vld [vmem:[#allocation6 + $0xc8] sm:$0xff]
        %v374 = vld [vmem:[#allocation6 + $0xd0] sm:$0xff]
        %v375 = vld [vmem:[#allocation6 + $0xd8] sm:$0xff]
        %v376 = vld [vmem:[#allocation6 + $0xe0] sm:$0xff]
        %v377 = vld [vmem:[#allocation6 + $0xe8] sm:$0xff]
        %v378 = vld [vmem:[#allocation6 + $0xf0] sm:$0xff]
        %v379 = vld [vmem:[#allocation6 + $0xf8] sm:$0xff]
        %v380 = vld [vmem:[%s319] sm:$0xf]
        %v382 = vlaneseq
        %v383 = vshrl.u32 %v382, 7
        %v384 = vsub.s32 0, %v383
        %v385 = vrot.slane %v380, %v384
        %v386 = vlaneseq
        %v387 = vshrl.u32 %v386, 7
        %v388 = vsub.s32 1, %v387
        %v389 = vrot.slane %v380, %v388
        %v390 = vlaneseq
        %v391 = vshrl.u32 %v390, 7
        %v392 = vsub.s32 2, %v391
        %v393 = vrot.slane %v380, %v392
        %v394 = vlaneseq
        %v395 = vshrl.u32 %v394, 7
        %v396 = vsub.s32 3, %v395
        %v397 = vrot.slane %v380, %v396
        %v434 = vunpack.c.l.b16 %v348
        %v435 = vunpack.c.h.b16 %v348
        %v436 = vunpack.c.l.b16 %v349
        %v437 = vunpack.c.h.b16 %v349
        %v438 = vunpack.c.l.b16 %v350
        %v439 = vunpack.c.h.b16 %v350
        %v440 = vunpack.c.l.b16 %v351
        %v441 = vunpack.c.h.b16 %v351
        %v442 = vunpack.c.l.b16 %v352
        %v443 = vunpack.c.h.b16 %v352
        %v444 = vunpack.c.l.b16 %v353
        %v445 = vunpack.c.h.b16 %v353
        %v446 = vunpack.c.l.b16 %v354
        %v447 = vunpack.c.h.b16 %v354
        %v448 = vunpack.c.l.b16 %v355
        %v449 = vunpack.c.h.b16 %v355
        %v450 = vunpack.c.l.b16 %v356
        %v451 = vunpack.c.h.b16 %v356
        %v452 = vunpack.c.l.b16 %v357
        %v453 = vunpack.c.h.b16 %v357
        %v454 = vunpack.c.l.b16 %v358
        %v455 = vunpack.c.h.b16 %v358
        %v456 = vunpack.c.l.b16 %v359
        %v457 = vunpack.c.h.b16 %v359
        %v458 = vunpack.c.l.b16 %v360
        %v459 = vunpack.c.h.b16 %v360
        %v460 = vunpack.c.l.b16 %v361
        %v461 = vunpack.c.h.b16 %v361
        %v462 = vunpack.c.l.b16 %v362
        %v463 = vunpack.c.h.b16 %v362
        %v464 = vunpack.c.l.b16 %v363
        %v465 = vunpack.c.h.b16 %v363
        %v466 = vunpack.c.l.b16 %v364
        %v467 = vunpack.c.h.b16 %v364
        %v468 = vunpack.c.l.b16 %v365
        %v469 = vunpack.c.h.b16 %v365
        %v470 = vunpack.c.l.b16 %v366
        %v471 = vunpack.c.h.b16 %v366
        %v472 = vunpack.c.l.b16 %v367
        %v473 = vunpack.c.h.b16 %v367
        %v474 = vunpack.c.l.b16 %v368
        %v475 = vunpack.c.h.b16 %v368
        %v476 = vunpack.c.l.b16 %v369
        %v477 = vunpack.c.h.b16 %v369
        %v478 = vunpack.c.l.b16 %v370
        %v479 = vunpack.c.h.b16 %v370
        %v480 = vunpack.c.l.b16 %v371
        %v481 = vunpack.c.h.b16 %v371
        %v482 = vunpack.c.l.b16 %v372
        %v483 = vunpack.c.h.b16 %v372
        %v484 = vunpack.c.l.b16 %v373
        %v485 = vunpack.c.h.b16 %v373
        %v486 = vunpack.c.l.b16 %v374
        %v487 = vunpack.c.h.b16 %v374
        %v488 = vunpack.c.l.b16 %v375
        %v489 = vunpack.c.h.b16 %v375
        %v490 = vunpack.c.l.b16 %v376
        %v491 = vunpack.c.h.b16 %v376
        %v492 = vunpack.c.l.b16 %v377
        %v493 = vunpack.c.h.b16 %v377
        %v494 = vunpack.c.l.b16 %v378
        %v495 = vunpack.c.h.b16 %v378
        %v496 = vunpack.c.l.b16 %v379
        %v497 = vunpack.c.h.b16 %v379
        %v498 = vpack.c.b16 %v438, %v434
        %v499 = vpack.c.b16 %v439, %v435
        %v500 = vpack.c.b16 %v440, %v436
        %v501 = vpack.c.b16 %v441, %v437
        %v502 = vpack.c.b16 %v446, %v442
        %v503 = vpack.c.b16 %v447, %v443
        %v504 = vpack.c.b16 %v448, %v444
        %v505 = vpack.c.b16 %v449, %v445
        %v506 = vpack.c.b16 %v454, %v450
        %v507 = vpack.c.b16 %v455, %v451
        %v508 = vpack.c.b16 %v456, %v452
        %v509 = vpack.c.b16 %v457, %v453
        %v510 = vpack.c.b16 %v462, %v458
        %v511 = vpack.c.b16 %v463, %v459
        %v512 = vpack.c.b16 %v464, %v460
        %v513 = vpack.c.b16 %v465, %v461
        %v514 = vpack.c.b16 %v470, %v466
        %v515 = vpack.c.b16 %v471, %v467
        %v516 = vpack.c.b16 %v472, %v468
        %v517 = vpack.c.b16 %v473, %v469
        %v518 = vpack.c.b16 %v478, %v474
        %v519 = vpack.c.b16 %v479, %v475
        %v520 = vpack.c.b16 %v480, %v476
        %v521 = vpack.c.b16 %v481, %v477
        %v522 = vpack.c.b16 %v486, %v482
        %v523 = vpack.c.b16 %v487, %v483
        %v524 = vpack.c.b16 %v488, %v484
        %v525 = vpack.c.b16 %v489, %v485
        %v526 = vpack.c.b16 %v494, %v490
        %v527 = vpack.c.b16 %v495, %v491
        %v528 = vpack.c.b16 %v496, %v492
        %v529 = vpack.c.b16 %v497, %v493
        %562 = vmatprep.subr.bf16.mxu0 %v499
        %563 = vmatpush1.bf16.msra.mxu0 %v498
        %564 = vmatprep.subr.bf16.mxu0 %v503
        %565 = vmatpush1.bf16.msra.mxu0 %v502
        %566 = vmatprep.subr.bf16.mxu0 %v507
        %567 = vmatpush1.bf16.msra.mxu0 %v506
        %568 = vmatprep.subr.bf16.mxu0 %v511
        %569 = vmatpush1.bf16.msra.mxu0 %v510
        %570 = vmatprep.subr.bf16.mxu0 %v515
        %571 = vmatpush1.bf16.msra.mxu0 %v514
        %572 = vmatprep.subr.bf16.mxu0 %v519
        %573 = vmatpush1.bf16.msra.mxu0 %v518
        %574 = vmatprep.subr.bf16.mxu0 %v523
        %575 = vmatpush1.bf16.msra.mxu0 %v522
        %576 = vmatprep.subr.bf16.mxu0 %v527
        %577 = vmatpush1.bf16.msra.mxu0 %v526
        %578 = vmatprep.subr.bf16.mxu0 0
        %579 = vmatpush1.bf16.msra.mxu0 0
        %580 = vmatprep.subr.bf16.mxu0 0
        %581 = vmatpush1.bf16.msra.mxu0 0
        %582 = vmatprep.subr.bf16.mxu0 0
        %583 = vmatpush1.bf16.msra.mxu0 0
        %584 = vmatprep.subr.bf16.mxu0 0
        %585 = vmatpush1.bf16.msra.mxu0 0
        %586 = vmatprep.subr.bf16.mxu0 0
        %587 = vmatpush1.bf16.msra.mxu0 0
        %588 = vmatprep.subr.bf16.mxu0 0
        %589 = vmatpush1.bf16.msra.mxu0 0
        %590 = vmatprep.subr.bf16.mxu0 0
        %591 = vmatpush1.bf16.msra.mxu0 0
        %592 = vmatprep.subr.bf16.mxu0 0
        %593 = vmatpush1.bf16.msra.mxu0 0
        %594 = vmatprep.mubr.bf16.mxu0 0
        %595 = vmatmul.mubr.bf16.gmra.mrb[0].mxu0 %v344
        %v596 = vpop.f32.mrb[0].mxu0
        %v597 = vadd.f32 %v385, %v596
        %v598 = vpop.f32.mrb[0].mxu0
        %v599 = vadd.f32 %v389, %v598
        %v600 = vpop.f32.mrb[0].mxu0
        %v601 = vadd.f32 %v385, %v600
        %v602 = vpop.f32.mrb[0].mxu0
        %v603 = vadd.f32 %v389, %v602
        %604 = vmatprep.mubr.bf16.mxu0 0
        %605 = vmatmul.mubr.bf16.gmra.mrb[0].mxu0 %v345
        %v606 = vpop.f32.mrb[0].mxu0
        %v607 = vadd.f32 %v385, %v606
        %v608 = vpop.f32.mrb[0].mxu0
        %v609 = vadd.f32 %v389, %v608
        %v610 = vpop.f32.mrb[0].mxu0
        %v611 = vadd.f32 %v385, %v610
        %v612 = vpop.f32.mrb[0].mxu0
        %v613 = vadd.f32 %v389, %v612
        %614 = vmatprep.mubr.bf16.mxu0 0
        %615 = vmatmul.mubr.bf16.gmra.mrb[0].mxu0 %v346
        %v616 = vpop.f32.mrb[0].mxu0
        %v617 = vadd.f32 %v385, %v616
        %v618 = vpop.f32.mrb[0].mxu0
        %v619 = vadd.f32 %v389, %v618
        %v620 = vpop.f32.mrb[0].mxu0
        %v621 = vadd.f32 %v385, %v620
        %v622 = vpop.f32.mrb[0].mxu0
        %v623 = vadd.f32 %v389, %v622
        %624 = vmatprep.mubr.bf16.mxu0 0
        %625 = vmatmul.mubr.bf16.gmra.mrb[0].mxu0 %v347
        %v626 = vpop.f32.mrb[0].mxu0
        %v627 = vadd.f32 %v385, %v626
        %v628 = vpop.f32.mrb[0].mxu0
        %v629 = vadd.f32 %v389, %v628
        %v630 = vpop.f32.mrb[0].mxu0
        %v631 = vadd.f32 %v385, %v630
        %v632 = vpop.f32.mrb[0].mxu0
        %v633 = vadd.f32 %v389, %v632
        %634 = vdwg.mxu0
        %635 = vmatprep.subr.bf16.mxu0 %v501
        %636 = vmatpush1.bf16.msra.mxu0 %v500
        %637 = vmatprep.subr.bf16.mxu0 %v505
        %638 = vmatpush1.bf16.msra.mxu0 %v504
        %639 = vmatprep.subr.bf16.mxu0 %v509
        %640 = vmatpush1.bf16.msra.mxu0 %v508
        %641 = vmatprep.subr.bf16.mxu0 %v513
        %642 = vmatpush1.bf16.msra.mxu0 %v512
        %643 = vmatprep.subr.bf16.mxu0 %v517
        %644 = vmatpush1.bf16.msra.mxu0 %v516
        %645 = vmatprep.subr.bf16.mxu0 %v521
        %646 = vmatpush1.bf16.msra.mxu0 %v520
        %647 = vmatprep.subr.bf16.mxu0 %v525
        %648 = vmatpush1.bf16.msra.mxu0 %v524
        %649 = vmatprep.subr.bf16.mxu0 %v529
        %650 = vmatpush1.bf16.msra.mxu0 %v528
        %651 = vmatprep.subr.bf16.mxu0 0
        %652 = vmatpush1.bf16.msra.mxu0 0
        %653 = vmatprep.subr.bf16.mxu0 0
        %654 = vmatpush1.bf16.msra.mxu0 0
        %655 = vmatprep.subr.bf16.mxu0 0
        %656 = vmatpush1.bf16.msra.mxu0 0
        %657 = vmatprep.subr.bf16.mxu0 0
        %658 = vmatpush1.bf16.msra.mxu0 0
        %659 = vmatprep.subr.bf16.mxu0 0
        %660 = vmatpush1.bf16.msra.mxu0 0
        %661 = vmatprep.subr.bf16.mxu0 0
        %662 = vmatpush1.bf16.msra.mxu0 0
        %663 = vmatprep.subr.bf16.mxu0 0
        %664 = vmatpush1.bf16.msra.mxu0 0
        %665 = vmatprep.subr.bf16.mxu0 0
        %666 = vmatpush1.bf16.msra.mxu0 0
        %667 = vmatprep.mubr.bf16.mxu0 0
        %668 = vmatmul.mubr.bf16.gmra.mrb[0].mxu0 %v344
        %v669 = vpop.f32.mrb[0].mxu0
        %v670 = vadd.f32 %v393, %v669
        %v671 = vpop.f32.mrb[0].mxu0
        %v672 = vadd.f32 %v397, %v671
        %v673 = vpop.f32.mrb[0].mxu0
        %v674 = vadd.f32 %v393, %v673
        %v675 = vpop.f32.mrb[0].mxu0
        %v676 = vadd.f32 %v397, %v675
        %677 = vmatprep.mubr.bf16.mxu0 0
        %678 = vmatmul.mubr.bf16.gmra.mrb[0].mxu0 %v345
        %v679 = vpop.f32.mrb[0].mxu0
        %v680 = vadd.f32 %v393, %v679
        %v681 = vpop.f32.mrb[0].mxu0
        %v682 = vadd.f32 %v397, %v681
        %v683 = vpop.f32.mrb[0].mxu0
        %v684 = vadd.f32 %v393, %v683
        %v685 = vpop.f32.mrb[0].mxu0
        %v686 = vadd.f32 %v397, %v685
        %687 = vmatprep.mubr.bf16.mxu0 0
        %688 = vmatmul.mubr.bf16.gmra.mrb[0].mxu0 %v346
        %v689 = vpop.f32.mrb[0].mxu0
        %v690 = vadd.f32 %v393, %v689
        %v691 = vpop.f32.mrb[0].mxu0
        %v692 = vadd.f32 %v397, %v691
        %v693 = vpop.f32.mrb[0].mxu0
        %v694 = vadd.f32 %v393, %v693
        %v695 = vpop.f32.mrb[0].mxu0
        %v696 = vadd.f32 %v397, %v695
        %697 = vmatprep.mubr.bf16.mxu0 0
        %698 = vmatmul.mubr.bf16.gmra.mrb[0].mxu0 %v347
        %v699 = vpop.f32.mrb[0].mxu0
        %v700 = vadd.f32 %v393, %v699
        %v701 = vpop.f32.mrb[0].mxu0
        %v702 = vadd.f32 %v397, %v701
        %v703 = vpop.f32.mrb[0].mxu0
        %v704 = vadd.f32 %v393, %v703
        %v705 = vpop.f32.mrb[0].mxu0
        %v706 = vadd.f32 %v397, %v705
        %707 = vdwg.mxu0
        %v708 = vmul.f32 %v597, 0.5
        %v709 = vmul.f32 %v599, 0.5
        %v710 = vmul.f32 %v670, 0.5
        %v711 = vmul.f32 %v672, 0.5
        %v712 = vmul.f32 %v601, 0.5
        %v713 = vmul.f32 %v603, 0.5
        %v714 = vmul.f32 %v674, 0.5
        %v715 = vmul.f32 %v676, 0.5
        %v716 = vmul.f32 %v607, 0.5
        %v717 = vmul.f32 %v609, 0.5
        %v718 = vmul.f32 %v680, 0.5
        %v719 = vmul.f32 %v682, 0.5
        %v720 = vmul.f32 %v611, 0.5
        %v721 = vmul.f32 %v613, 0.5
        %v722 = vmul.f32 %v684, 0.5
        %v723 = vmul.f32 %v686, 0.5
        %v724 = vmul.f32 %v617, 0.5
        %v725 = vmul.f32 %v619, 0.5
        %v726 = vmul.f32 %v690, 0.5
        %v727 = vmul.f32 %v692, 0.5
        %v728 = vmul.f32 %v621, 0.5
        %v729 = vmul.f32 %v623, 0.5
        %v730 = vmul.f32 %v694, 0.5
        %v731 = vmul.f32 %v696, 0.5
        %v732 = vmul.f32 %v627, 0.5
        %v733 = vmul.f32 %v629, 0.5
        %v734 = vmul.f32 %v700, 0.5
        %v735 = vmul.f32 %v702, 0.5
        %v736 = vmul.f32 %v631, 0.5
        %v737 = vmul.f32 %v633, 0.5
        %v738 = vmul.f32 %v704, 0.5
        %v739 = vmul.f32 %v706, 0.5
        %v740 = vmul.f32 %v597, 0.044715
        %v741 = vmul.f32 %v599, 0.044715
        %v742 = vmul.f32 %v670, 0.044715
        %v743 = vmul.f32 %v672, 0.044715
        %v744 = vmul.f32 %v601, 0.044715
        %v745 = vmul.f32 %v603, 0.044715
        %v746 = vmul.f32 %v674, 0.044715
        %v747 = vmul.f32 %v676, 0.044715
        %v748 = vmul.f32 %v607, 0.044715
        %v749 = vmul.f32 %v609, 0.044715
        %v750 = vmul.f32 %v680, 0.044715
        %v751 = vmul.f32 %v682, 0.044715
        %v752 = vmul.f32 %v611, 0.044715
        %v753 = vmul.f32 %v613, 0.044715
        %v754 = vmul.f32 %v684, 0.044715
        %v755 = vmul.f32 %v686, 0.044715
        %v756 = vmul.f32 %v617, 0.044715
        %v757 = vmul.f32 %v619, 0.044715
        %v758 = vmul.f32 %v690, 0.044715
        %v759 = vmul.f32 %v692, 0.044715
        %v760 = vmul.f32 %v621, 0.044715
        %v761 = vmul.f32 %v623, 0.044715
        %v762 = vmul.f32 %v694, 0.044715
        %v763 = vmul.f32 %v696, 0.044715
        %v764 = vmul.f32 %v627, 0.044715
        %v765 = vmul.f32 %v629, 0.044715
        %v766 = vmul.f32 %v700, 0.044715
        %v767 = vmul.f32 %v702, 0.044715
        %v768 = vmul.f32 %v631, 0.044715
        %v769 = vmul.f32 %v633, 0.044715
        %v770 = vmul.f32 %v704, 0.044715
        %v771 = vmul.f32 %v706, 0.044715
        %v772 = vmul.f32 %v740, %v597
        %v773 = vmul.f32 %v741, %v599
        %v774 = vmul.f32 %v742, %v670
        %v775 = vmul.f32 %v743, %v672
        %v776 = vmul.f32 %v744, %v601
        %v777 = vmul.f32 %v745, %v603
        %v778 = vmul.f32 %v746, %v674
        %v779 = vmul.f32 %v747, %v676
        %v780 = vmul.f32 %v748, %v607
        %v781 = vmul.f32 %v749, %v609
        %v782 = vmul.f32 %v750, %v680
        %v783 = vmul.f32 %v751, %v682
        %v784 = vmul.f32 %v752, %v611
        %v785 = vmul.f32 %v753, %v613
        %v786 = vmul.f32 %v754, %v684
        %v787 = vmul.f32 %v755, %v686
        %v788 = vmul.f32 %v756, %v617
        %v789 = vmul.f32 %v757, %v619
        %v790 = vmul.f32 %v758, %v690
        %v791 = vmul.f32 %v759, %v692
        %v792 = vmul.f32 %v760, %v621
        %v793 = vmul.f32 %v761, %v623
        %v794 = vmul.f32 %v762, %v694
        %v795 = vmul.f32 %v763, %v696
        %v796 = vmul.f32 %v764, %v627
        %v797 = vmul.f32 %v765, %v629
        %v798 = vmul.f32 %v766, %v700
        %v799 = vmul.f32 %v767, %v702
        %v800 = vmul.f32 %v768, %v631
        %v801 = vmul.f32 %v769, %v633
        %v802 = vmul.f32 %v770, %v704
        %v803 = vmul.f32 %v771, %v706
        %v804 = vmul.f32 %v772, %v597
        %v805 = vmul.f32 %v773, %v599
        %v806 = vmul.f32 %v774, %v670
        %v807 = vmul.f32 %v775, %v672
        %v808 = vmul.f32 %v776, %v601
        %v809 = vmul.f32 %v777, %v603
        %v810 = vmul.f32 %v778, %v674
        %v811 = vmul.f32 %v779, %v676
        %v812 = vmul.f32 %v780, %v607
        %v813 = vmul.f32 %v781, %v609
        %v814 = vmul.f32 %v782, %v680
        %v815 = vmul.f32 %v783, %v682
        %v816 = vmul.f32 %v784, %v611
        %v817 = vmul.f32 %v785, %v613
        %v818 = vmul.f32 %v786, %v684
        %v819 = vmul.f32 %v787, %v686
        %v820 = vmul.f32 %v788, %v617
        %v821 = vmul.f32 %v789, %v619
        %v822 = vmul.f32 %v790, %v690
        %v823 = vmul.f32 %v791, %v692
        %v824 = vmul.f32 %v792, %v621
        %v825 = vmul.f32 %v793, %v623
        %v826 = vmul.f32 %v794, %v694
        %v827 = vmul.f32 %v795, %v696
        %v828 = vmul.f32 %v796, %v627
        %v829 = vmul.f32 %v797, %v629
        %v830 = vmul.f32 %v798, %v700
        %v831 = vmul.f32 %v799, %v702
        %v832 = vmul.f32 %v800, %v631
        %v833 = vmul.f32 %v801, %v633
        %v834 = vmul.f32 %v802, %v704
        %v835 = vmul.f32 %v803, %v706
        %v836 = vadd.f32 %v597, %v804
        %v837 = vadd.f32 %v599, %v805
        %v838 = vadd.f32 %v670, %v806
        %v839 = vadd.f32 %v672, %v807
        %v840 = vadd.f32 %v601, %v808
        %v841 = vadd.f32 %v603, %v809
        %v842 = vadd.f32 %v674, %v810
        %v843 = vadd.f32 %v676, %v811
        %v844 = vadd.f32 %v607, %v812
        %v845 = vadd.f32 %v609, %v813
        %v846 = vadd.f32 %v680, %v814
        %v847 = vadd.f32 %v682, %v815
        %v848 = vadd.f32 %v611, %v816
        %v849 = vadd.f32 %v613, %v817
        %v850 = vadd.f32 %v684, %v818
        %v851 = vadd.f32 %v686, %v819
        %v852 = vadd.f32 %v617, %v820
        %v853 = vadd.f32 %v619, %v821
        %v854 = vadd.f32 %v690, %v822
        %v855 = vadd.f32 %v692, %v823
        %v856 = vadd.f32 %v621, %v824
        %v857 = vadd.f32 %v623, %v825
        %v858 = vadd.f32 %v694, %v826
        %v859 = vadd.f32 %v696, %v827
        %v860 = vadd.f32 %v627, %v828
        %v861 = vadd.f32 %v629, %v829
        %v862 = vadd.f32 %v700, %v830
        %v863 = vadd.f32 %v702, %v831
        %v864 = vadd.f32 %v631, %v832
        %v865 = vadd.f32 %v633, %v833
        %v866 = vadd.f32 %v704, %v834
        %v867 = vadd.f32 %v706, %v835
        %v868 = vmul.f32 %v836, 0.7978846
        %v869 = vmul.f32 %v837, 0.7978846
        %v870 = vmul.f32 %v838, 0.7978846
        %v871 = vmul.f32 %v839, 0.7978846
        %v872 = vmul.f32 %v840, 0.7978846
        %v873 = vmul.f32 %v841, 0.7978846
        %v874 = vmul.f32 %v842, 0.7978846
        %v875 = vmul.f32 %v843, 0.7978846
        %v876 = vmul.f32 %v844, 0.7978846
        %v877 = vmul.f32 %v845, 0.7978846
        %v878 = vmul.f32 %v846, 0.7978846
        %v879 = vmul.f32 %v847, 0.7978846
        %v880 = vmul.f32 %v848, 0.7978846
        %v881 = vmul.f32 %v849, 0.7978846
        %v882 = vmul.f32 %v850, 0.7978846
        %v883 = vmul.f32 %v851, 0.7978846
        %v884 = vmul.f32 %v852, 0.7978846
        %v885 = vmul.f32 %v853, 0.7978846
        %v886 = vmul.f32 %v854, 0.7978846
        %v887 = vmul.f32 %v855, 0.7978846
        %v888 = vmul.f32 %v856, 0.7978846
        %v889 = vmul.f32 %v857, 0.7978846
        %v890 = vmul.f32 %v858, 0.7978846
        %v891 = vmul.f32 %v859, 0.7978846
        %v892 = vmul.f32 %v860, 0.7978846
        %v893 = vmul.f32 %v861, 0.7978846
        %v894 = vmul.f32 %v862, 0.7978846
        %v895 = vmul.f32 %v863, 0.7978846
        %v896 = vmul.f32 %v864, 0.7978846
        %v897 = vmul.f32 %v865, 0.7978846
        %v898 = vmul.f32 %v866, 0.7978846
        %v899 = vmul.f32 %v867, 0.7978846
        %v900 = vtanh.pop %v868
        %v901 = vtanh.pop %v869
        %v902 = vtanh.pop %v870
        %v903 = vtanh.pop %v871
        %v904 = vtanh.pop %v872
        %v905 = vtanh.pop %v873
        %v906 = vtanh.pop %v874
        %v907 = vtanh.pop %v875
        %v908 = vtanh.pop %v876
        %v909 = vtanh.pop %v877
        %v910 = vtanh.pop %v878
        %v911 = vtanh.pop %v879
        %v912 = vtanh.pop %v880
        %v913 = vtanh.pop %v881
        %v914 = vtanh.pop %v882
        %v915 = vtanh.pop %v883
        %v916 = vtanh.pop %v884
        %v917 = vtanh.pop %v885
        %v918 = vtanh.pop %v886
        %v919 = vtanh.pop %v887
        %v920 = vtanh.pop %v888
        %v921 = vtanh.pop %v889
        %v922 = vtanh.pop %v890
        %v923 = vtanh.pop %v891
        %v924 = vtanh.pop %v892
        %v925 = vtanh.pop %v893
        %v926 = vtanh.pop %v894
        %v927 = vtanh.pop %v895
        %v928 = vtanh.pop %v896
        %v929 = vtanh.pop %v897
        %v930 = vtanh.pop %v898
        %v931 = vtanh.pop %v899
        %v932 = vadd.f32 %v900, 1.0
        %v933 = vadd.f32 %v901, 1.0
        %v934 = vadd.f32 %v902, 1.0
        %v935 = vadd.f32 %v903, 1.0
        %v936 = vadd.f32 %v904, 1.0
        %v937 = vadd.f32 %v905, 1.0
        %v938 = vadd.f32 %v906, 1.0
        %v939 = vadd.f32 %v907, 1.0
        %v940 = vadd.f32 %v908, 1.0
        %v941 = vadd.f32 %v909, 1.0
        %v942 = vadd.f32 %v910, 1.0
        %v943 = vadd.f32 %v911, 1.0
        %v944 = vadd.f32 %v912, 1.0
        %v945 = vadd.f32 %v913, 1.0
        %v946 = vadd.f32 %v914, 1.0
        %v947 = vadd.f32 %v915, 1.0
        %v948 = vadd.f32 %v916, 1.0
        %v949 = vadd.f32 %v917, 1.0
        %v950 = vadd.f32 %v918, 1.0
        %v951 = vadd.f32 %v919, 1.0
        %v952 = vadd.f32 %v920, 1.0
        %v953 = vadd.f32 %v921, 1.0
        %v954 = vadd.f32 %v922, 1.0
        %v955 = vadd.f32 %v923, 1.0
        %v956 = vadd.f32 %v924, 1.0
        %v957 = vadd.f32 %v925, 1.0
        %v958 = vadd.f32 %v926, 1.0
        %v959 = vadd.f32 %v927, 1.0
        %v960 = vadd.f32 %v928, 1.0
        %v961 = vadd.f32 %v929, 1.0
        %v962 = vadd.f32 %v930, 1.0
        %v963 = vadd.f32 %v931, 1.0
        %v964 = vmul.f32 %v708, %v932
        %v965 = vmul.f32 %v709, %v933
        %v966 = vmul.f32 %v710, %v934
        %v967 = vmul.f32 %v711, %v935
        %v968 = vmul.f32 %v712, %v936
        %v969 = vmul.f32 %v713, %v937
        %v970 = vmul.f32 %v714, %v938
        %v971 = vmul.f32 %v715, %v939
        %v972 = vmul.f32 %v716, %v940
        %v973 = vmul.f32 %v717, %v941
        %v974 = vmul.f32 %v718, %v942
        %v975 = vmul.f32 %v719, %v943
        %v976 = vmul.f32 %v720, %v944
        %v977 = vmul.f32 %v721, %v945
        %v978 = vmul.f32 %v722, %v946
        %v979 = vmul.f32 %v723, %v947
        %v980 = vmul.f32 %v724, %v948
        %v981 = vmul.f32 %v725, %v949
        %v982 = vmul.f32 %v726, %v950
        %v983 = vmul.f32 %v727, %v951
        %v984 = vmul.f32 %v728, %v952
        %v985 = vmul.f32 %v729, %v953
        %v986 = vmul.f32 %v730, %v954
        %v987 = vmul.f32 %v731, %v955
        %v988 = vmul.f32 %v732, %v956
        %v989 = vmul.f32 %v733, %v957
        %v990 = vmul.f32 %v734, %v958
        %v991 = vmul.f32 %v735, %v959
        %v992 = vmul.f32 %v736, %v960
        %v993 = vmul.f32 %v737, %v961
        %v994 = vmul.f32 %v738, %v962
        %v995 = vmul.f32 %v739, %v963
        %v996 = vld [vmem:[#allocation2] sm:$0xff]
        %v997 = vld [vmem:[#allocation2 + $0x8] sm:$0xff]
        %v998 = vld [vmem:[#allocation2 + $0x10] sm:$0xff]
        %v999 = vld [vmem:[#allocation2 + $0x18] sm:$0xff]
        %v1000 = vld [vmem:[#allocation2 + $0x20] sm:$0xff]
        %v1001 = vld [vmem:[#allocation2 + $0x28] sm:$0xff]
        %v1002 = vld [vmem:[#allocation2 + $0x30] sm:$0xff]
        %v1003 = vld [vmem:[#allocation2 + $0x38] sm:$0xff]
        %v1004 = vpack.c.bf16 %v968, %v964
        %v1005 = vpack.c.bf16 %v969, %v965
        %v1006 = vpack.c.bf16 %v970, %v966
        %v1007 = vpack.c.bf16 %v971, %v967
        %v1008 = vpack.c.bf16 %v976, %v972
        %v1009 = vpack.c.bf16 %v977, %v973
        %v1010 = vpack.c.bf16 %v978, %v974
        %v1011 = vpack.c.bf16 %v979, %v975
        %v1012 = vpack.c.bf16 %v984, %v980
        %v1013 = vpack.c.bf16 %v985, %v981
        %v1014 = vpack.c.bf16 %v986, %v982
        %v1015 = vpack.c.bf16 %v987, %v983
        %v1016 = vpack.c.bf16 %v992, %v988
        %v1017 = vpack.c.bf16 %v993, %v989
        %v1018 = vpack.c.bf16 %v994, %v990
        %v1019 = vpack.c.bf16 %v995, %v991
        %v1020 = vld [vmem:[#allocation8] sm:$0xf]
        %v1021 = vld [vmem:[#allocation8 + $0x4] sm:$0xf]
        %v1022 = vld [vmem:[#allocation8 + $0x8] sm:$0xf]
        %v1023 = vld [vmem:[#allocation8 + $0xc] sm:$0xf]
        %v1024 = vld [vmem:[#allocation8 + $0x10] sm:$0xf]
        %v1025 = vld [vmem:[#allocation8 + $0x14] sm:$0xf]
        %v1026 = vld [vmem:[#allocation8 + $0x18] sm:$0xf]
        %v1027 = vld [vmem:[#allocation8 + $0x1c] sm:$0xf]
        %v1028 = vld [vmem:[#allocation8 + $0x20] sm:$0xf]
        %v1029 = vld [vmem:[#allocation8 + $0x24] sm:$0xf]
        %v1030 = vld [vmem:[#allocation8 + $0x28] sm:$0xf]
        %v1031 = vld [vmem:[#allocation8 + $0x2c] sm:$0xf]
        %v1032 = vld [vmem:[#allocation8 + $0x30] sm:$0xf]
        %v1033 = vld [vmem:[#allocation8 + $0x34] sm:$0xf]
        %v1034 = vld [vmem:[#allocation8 + $0x38] sm:$0xf]
        %v1035 = vld [vmem:[#allocation8 + $0x3c] sm:$0xf]
        %v1036 = vld [vmem:[#allocation8 + $0x40] sm:$0xf]
        %v1037 = vld [vmem:[#allocation8 + $0x44] sm:$0xf]
        %v1038 = vld [vmem:[#allocation8 + $0x48] sm:$0xf]
        %v1039 = vld [vmem:[#allocation8 + $0x4c] sm:$0xf]
        %v1040 = vld [vmem:[#allocation8 + $0x50] sm:$0xf]
        %v1041 = vld [vmem:[#allocation8 + $0x54] sm:$0xf]
        %v1042 = vld [vmem:[#allocation8 + $0x58] sm:$0xf]
        %v1043 = vld [vmem:[#allocation8 + $0x5c] sm:$0xf]
        %v1044 = vld [vmem:[#allocation8 + $0x60] sm:$0xf]
        %v1045 = vld [vmem:[#allocation8 + $0x64] sm:$0xf]
        %v1046 = vld [vmem:[#allocation8 + $0x68] sm:$0xf]
        %v1047 = vld [vmem:[#allocation8 + $0x6c] sm:$0xf]
        %v1048 = vld [vmem:[#allocation8 + $0x70] sm:$0xf]
        %v1049 = vld [vmem:[#allocation8 + $0x74] sm:$0xf]
        %v1050 = vld [vmem:[#allocation8 + $0x78] sm:$0xf]
        %v1051 = vld [vmem:[#allocation8 + $0x7c] sm:$0xf]
        %v1052 = vld [vmem:[#allocation8 + $0x80] sm:$0xf]
        %v1053 = vld [vmem:[#allocation8 + $0x84] sm:$0xf]
        %v1054 = vld [vmem:[#allocation8 + $0x88] sm:$0xf]
        %v1055 = vld [vmem:[#allocation8 + $0x8c] sm:$0xf]
        %v1056 = vld [vmem:[#allocation8 + $0x90] sm:$0xf]
        %v1057 = vld [vmem:[#allocation8 + $0x94] sm:$0xf]
        %v1058 = vld [vmem:[#allocation8 + $0x98] sm:$0xf]
        %v1059 = vld [vmem:[#allocation8 + $0x9c] sm:$0xf]
        %v1060 = vld [vmem:[#allocation8 + $0xa0] sm:$0xf]
        %v1061 = vld [vmem:[#allocation8 + $0xa4] sm:$0xf]
        %v1062 = vld [vmem:[#allocation8 + $0xa8] sm:$0xf]
        %v1063 = vld [vmem:[#allocation8 + $0xac] sm:$0xf]
        %v1064 = vld [vmem:[#allocation8 + $0xb0] sm:$0xf]
        %v1065 = vld [vmem:[#allocation8 + $0xb4] sm:$0xf]
        %v1066 = vld [vmem:[#allocation8 + $0xb8] sm:$0xf]
        %v1067 = vld [vmem:[#allocation8 + $0xbc] sm:$0xf]
        %v1068 = vld [vmem:[#allocation8 + $0xc0] sm:$0xf]
        %v1069 = vld [vmem:[#allocation8 + $0xc4] sm:$0xf]
        %v1070 = vld [vmem:[#allocation8 + $0xc8] sm:$0xf]
        %v1071 = vld [vmem:[#allocation8 + $0xcc] sm:$0xf]
        %v1072 = vld [vmem:[#allocation8 + $0xd0] sm:$0xf]
        %v1073 = vld [vmem:[#allocation8 + $0xd4] sm:$0xf]
        %v1074 = vld [vmem:[#allocation8 + $0xd8] sm:$0xf]
        %v1075 = vld [vmem:[#allocation8 + $0xdc] sm:$0xf]
        %v1076 = vld [vmem:[#allocation8 + $0xe0] sm:$0xf]
        %v1077 = vld [vmem:[#allocation8 + $0xe4] sm:$0xf]
        %v1078 = vld [vmem:[#allocation8 + $0xe8] sm:$0xf]
        %v1079 = vld [vmem:[#allocation8 + $0xec] sm:$0xf]
        %v1080 = vld [vmem:[#allocation8 + $0xf0] sm:$0xf]
        %v1081 = vld [vmem:[#allocation8 + $0xf4] sm:$0xf]
        %v1082 = vld [vmem:[#allocation8 + $0xf8] sm:$0xf]
        %v1083 = vld [vmem:[#allocation8 + $0xfc] sm:$0xf]
        %v1148 = vunpack.c.l.b16 %v1020
        %v1149 = vunpack.c.l.b16 %v1021
        %v1150 = vunpack.c.l.b16 %v1022
        %v1151 = vunpack.c.l.b16 %v1023
        %v1152 = vunpack.c.l.b16 %v1024
        %v1153 = vunpack.c.l.b16 %v1025
        %v1154 = vunpack.c.l.b16 %v1026
        %v1155 = vunpack.c.l.b16 %v1027
        %v1156 = vunpack.c.l.b16 %v1028
        %v1157 = vunpack.c.l.b16 %v1029
        %v1158 = vunpack.c.l.b16 %v1030
        %v1159 = vunpack.c.l.b16 %v1031
        %v1160 = vunpack.c.l.b16 %v1032
        %v1161 = vunpack.c.l.b16 %v1033
        %v1162 = vunpack.c.l.b16 %v1034
        %v1163 = vunpack.c.l.b16 %v1035
        %v1164 = vunpack.c.l.b16 %v1036
        %v1165 = vunpack.c.l.b16 %v1037
        %v1166 = vunpack.c.l.b16 %v1038
        %v1167 = vunpack.c.l.b16 %v1039
        %v1168 = vunpack.c.l.b16 %v1040
        %v1169 = vunpack.c.l.b16 %v1041
        %v1170 = vunpack.c.l.b16 %v1042
        %v1171 = vunpack.c.l.b16 %v1043
        %v1172 = vunpack.c.l.b16 %v1044
        %v1173 = vunpack.c.l.b16 %v1045
        %v1174 = vunpack.c.l.b16 %v1046
        %v1175 = vunpack.c.l.b16 %v1047
        %v1176 = vunpack.c.l.b16 %v1048
        %v1177 = vunpack.c.l.b16 %v1049
        %v1178 = vunpack.c.l.b16 %v1050
        %v1179 = vunpack.c.l.b16 %v1051
        %v1180 = vunpack.c.l.b16 %v1052
        %v1181 = vunpack.c.l.b16 %v1053
        %v1182 = vunpack.c.l.b16 %v1054
        %v1183 = vunpack.c.l.b16 %v1055
        %v1184 = vunpack.c.l.b16 %v1056
        %v1185 = vunpack.c.l.b16 %v1057
        %v1186 = vunpack.c.l.b16 %v1058
        %v1187 = vunpack.c.l.b16 %v1059
        %v1188 = vunpack.c.l.b16 %v1060
        %v1189 = vunpack.c.l.b16 %v1061
        %v1190 = vunpack.c.l.b16 %v1062
        %v1191 = vunpack.c.l.b16 %v1063
        %v1192 = vunpack.c.l.b16 %v1064
        %v1193 = vunpack.c.l.b16 %v1065
        %v1194 = vunpack.c.l.b16 %v1066
        %v1195 = vunpack.c.l.b16 %v1067
        %v1196 = vunpack.c.l.b16 %v1068
        %v1197 = vunpack.c.l.b16 %v1069
        %v1198 = vunpack.c.l.b16 %v1070
        %v1199 = vunpack.c.l.b16 %v1071
        %v1200 = vunpack.c.l.b16 %v1072
        %v1201 = vunpack.c.l.b16 %v1073
        %v1202 = vunpack.c.l.b16 %v1074
        %v1203 = vunpack.c.l.b16 %v1075
        %v1204 = vunpack.c.l.b16 %v1076
        %v1205 = vunpack.c.l.b16 %v1077
        %v1206 = vunpack.c.l.b16 %v1078
        %v1207 = vunpack.c.l.b16 %v1079
        %v1208 = vunpack.c.l.b16 %v1080
        %v1209 = vunpack.c.l.b16 %v1081
        %v1210 = vunpack.c.l.b16 %v1082
        %v1211 = vunpack.c.l.b16 %v1083
        %v1212 = vpack.c.b16 %v1149, %v1148
        %v1213 = vpack.c.b16 %v1151, %v1150
        %v1214 = vpack.c.b16 %v1153, %v1152
        %v1215 = vpack.c.b16 %v1155, %v1154
        %v1216 = vpack.c.b16 %v1157, %v1156
        %v1217 = vpack.c.b16 %v1159, %v1158
        %v1218 = vpack.c.b16 %v1161, %v1160
        %v1219 = vpack.c.b16 %v1163, %v1162
        %v1220 = vpack.c.b16 %v1165, %v1164
        %v1221 = vpack.c.b16 %v1167, %v1166
        %v1222 = vpack.c.b16 %v1169, %v1168
        %v1223 = vpack.c.b16 %v1171, %v1170
        %v1224 = vpack.c.b16 %v1173, %v1172
        %v1225 = vpack.c.b16 %v1175, %v1174
        %v1226 = vpack.c.b16 %v1177, %v1176
        %v1227 = vpack.c.b16 %v1179, %v1178
        %v1228 = vpack.c.b16 %v1181, %v1180
        %v1229 = vpack.c.b16 %v1183, %v1182
        %v1230 = vpack.c.b16 %v1185, %v1184
        %v1231 = vpack.c.b16 %v1187, %v1186
        %v1232 = vpack.c.b16 %v1189, %v1188
        %v1233 = vpack.c.b16 %v1191, %v1190
        %v1234 = vpack.c.b16 %v1193, %v1192
        %v1235 = vpack.c.b16 %v1195, %v1194
        %v1236 = vpack.c.b16 %v1197, %v1196
        %v1237 = vpack.c.b16 %v1199, %v1198
        %v1238 = vpack.c.b16 %v1201, %v1200
        %v1239 = vpack.c.b16 %v1203, %v1202
        %v1240 = vpack.c.b16 %v1205, %v1204
        %v1241 = vpack.c.b16 %v1207, %v1206
        %v1242 = vpack.c.b16 %v1209, %v1208
        %v1243 = vpack.c.b16 %v1211, %v1210
        %1276 = vmatprep.subr.bf16.mxu0 0
        %1277 = vmatpush1.bf16.msra.mxu0 %v1212
        %1278 = vmatprep.subr.bf16.mxu0 0
        %1279 = vmatpush1.bf16.msra.mxu0 %v1213
        %1280 = vmatprep.subr.bf16.mxu0 0
        %1281 = vmatpush1.bf16.msra.mxu0 %v1214
        %1282 = vmatprep.subr.bf16.mxu0 0
        %1283 = vmatpush1.bf16.msra.mxu0 %v1215
        %1284 = vmatprep.subr.bf16.mxu0 0
        %1285 = vmatpush1.bf16.msra.mxu0 %v1216
        %1286 = vmatprep.subr.bf16.mxu0 0
        %1287 = vmatpush1.bf16.msra.mxu0 %v1217
        %1288 = vmatprep.subr.bf16.mxu0 0
        %1289 = vmatpush1.bf16.msra.mxu0 %v1218
        %1290 = vmatprep.subr.bf16.mxu0 0
        %1291 = vmatpush1.bf16.msra.mxu0 %v1219
        %1292 = vmatprep.subr.bf16.mxu0 0
        %1293 = vmatpush1.bf16.msra.mxu0 %v1220
        %1294 = vmatprep.subr.bf16.mxu0 0
        %1295 = vmatpush1.bf16.msra.mxu0 %v1221
        %1296 = vmatprep.subr.bf16.mxu0 0
        %1297 = vmatpush1.bf16.msra.mxu0 %v1222
        %1298 = vmatprep.subr.bf16.mxu0 0
        %1299 = vmatpush1.bf16.msra.mxu0 %v1223
        %1300 = vmatprep.subr.bf16.mxu0 0
        %1301 = vmatpush1.bf16.msra.mxu0 %v1224
        %1302 = vmatprep.subr.bf16.mxu0 0
        %1303 = vmatpush1.bf16.msra.mxu0 %v1225
        %1304 = vmatprep.subr.bf16.mxu0 0
        %1305 = vmatpush1.bf16.msra.mxu0 %v1226
        %1306 = vmatprep.subr.bf16.mxu0 0
        %1307 = vmatpush1.bf16.msra.mxu0 %v1227
        %1308 = vmatprep.mubr.bf16.mxu0 %v1005
        %1309 = vmatmul.mubr.bf16.gmra.mrb[0].mxu0 %v1004
        %v1310 = vpop.f32.mrb[0].mxu0
        %v1311 = vadd.f32 0.0, %v1310
        %v1312 = vpop.f32.mrb[0].mxu0
        %v1313 = vpop.f32.mrb[0].mxu0
        %v1314 = vadd.f32 0.0, %v1313
        %v1315 = vpop.f32.mrb[0].mxu0
        %1316 = vmatprep.mubr.bf16.mxu0 %v1009
        %1317 = vmatmul.mubr.bf16.gmra.mrb[0].mxu0 %v1008
        %v1318 = vpop.f32.mrb[0].mxu0
        %v1319 = vadd.f32 0.0, %v1318
        %v1320 = vpop.f32.mrb[0].mxu0
        %v1321 = vpop.f32.mrb[0].mxu0
        %v1322 = vadd.f32 0.0, %v1321
        %v1323 = vpop.f32.mrb[0].mxu0
        %1324 = vmatprep.mubr.bf16.mxu0 %v1013
        %1325 = vmatmul.mubr.bf16.gmra.mrb[0].mxu0 %v1012
        %v1326 = vpop.f32.mrb[0].mxu0
        %v1327 = vadd.f32 0.0, %v1326
        %v1328 = vpop.f32.mrb[0].mxu0
        %v1329 = vpop.f32.mrb[0].mxu0
        %v1330 = vadd.f32 0.0, %v1329
        %v1331 = vpop.f32.mrb[0].mxu0
        %1332 = vmatprep.mubr.bf16.mxu0 %v1017
        %1333 = vmatmul.mubr.bf16.gmra.mrb[0].mxu0 %v1016
        %v1334 = vpop.f32.mrb[0].mxu0
        %v1335 = vadd.f32 0.0, %v1334
        %v1336 = vpop.f32.mrb[0].mxu0
        %v1337 = vpop.f32.mrb[0].mxu0
        %v1338 = vadd.f32 0.0, %v1337
        %v1339 = vpop.f32.mrb[0].mxu0
        %1340 = vdwg.mxu0
        %1341 = vmatprep.subr.bf16.mxu0 0
        %1342 = vmatpush1.bf16.msra.mxu0 %v1228
        %1343 = vmatprep.subr.bf16.mxu0 0
        %1344 = vmatpush1.bf16.msra.mxu0 %v1229
        %1345 = vmatprep.subr.bf16.mxu0 0
        %1346 = vmatpush1.bf16.msra.mxu0 %v1230
        %1347 = vmatprep.subr.bf16.mxu0 0
        %1348 = vmatpush1.bf16.msra.mxu0 %v1231
        %1349 = vmatprep.subr.bf16.mxu0 0
        %1350 = vmatpush1.bf16.msra.mxu0 %v1232
        %1351 = vmatprep.subr.bf16.mxu0 0
        %1352 = vmatpush1.bf16.msra.mxu0 %v1233
        %1353 = vmatprep.subr.bf16.mxu0 0
        %1354 = vmatpush1.bf16.msra.mxu0 %v1234
        %1355 = vmatprep.subr.bf16.mxu0 0
        %1356 = vmatpush1.bf16.msra.mxu0 %v1235
        %1357 = vmatprep.subr.bf16.mxu0 0
        %1358 = vmatpush1.bf16.msra.mxu0 %v1236
        %1359 = vmatprep.subr.bf16.mxu0 0
        %1360 = vmatpush1.bf16.msra.mxu0 %v1237
        %1361 = vmatprep.subr.bf16.mxu0 0
        %1362 = vmatpush1.bf16.msra.mxu0 %v1238
        %1363 = vmatprep.subr.bf16.mxu0 0
        %1364 = vmatpush1.bf16.msra.mxu0 %v1239
        %1365 = vmatprep.subr.bf16.mxu0 0
        %1366 = vmatpush1.bf16.msra.mxu0 %v1240
        %1367 = vmatprep.subr.bf16.mxu0 0
        %1368 = vmatpush1.bf16.msra.mxu0 %v1241
        %1369 = vmatprep.subr.bf16.mxu0 0
        %1370 = vmatpush1.bf16.msra.mxu0 %v1242
        %1371 = vmatprep.subr.bf16.mxu0 0
        %1372 = vmatpush1.bf16.msra.mxu0 %v1243
        %1373 = vmatprep.mubr.bf16.mxu0 %v1007
        %1374 = vmatmul.mubr.bf16.gmra.mrb[0].mxu0 %v1006
        %v1375 = vpop.f32.mrb[0].mxu0
        %v1376 = vadd.f32 %v1311, %v1375
        %v1377 = vpop.f32.mrb[0].mxu0
        %v1378 = vpop.f32.mrb[0].mxu0
        %v1379 = vadd.f32 %v1314, %v1378
        %v1380 = vpop.f32.mrb[0].mxu0
        %1381 = vmatprep.mubr.bf16.mxu0 %v1011
        %1382 = vmatmul.mubr.bf16.gmra.mrb[0].mxu0 %v1010
        %v1383 = vpop.f32.mrb[0].mxu0
        %v1384 = vadd.f32 %v1319, %v1383
        %v1385 = vpop.f32.mrb[0].mxu0
        %v1386 = vpop.f32.mrb[0].mxu0
        %v1387 = vadd.f32 %v1322, %v1386
        %v1388 = vpop.f32.mrb[0].mxu0
        %1389 = vmatprep.mubr.bf16.mxu0 %v1015
        %1390 = vmatmul.mubr.bf16.gmra.mrb[0].mxu0 %v1014
        %v1391 = vpop.f32.mrb[0].mxu0
        %v1392 = vadd.f32 %v1327, %v1391
        %v1393 = vpop.f32.mrb[0].mxu0
        %v1394 = vpop.f32.mrb[0].mxu0
        %v1395 = vadd.f32 %v1330, %v1394
        %v1396 = vpop.f32.mrb[0].mxu0
        %1397 = vmatprep.mubr.bf16.mxu0 %v1019
        %1398 = vmatmul.mubr.bf16.gmra.mrb[0].mxu0 %v1018
        %v1399 = vpop.f32.mrb[0].mxu0
        %v1400 = vadd.f32 %v1335, %v1399
        %v1401 = vpop.f32.mrb[0].mxu0
        %v1402 = vpop.f32.mrb[0].mxu0
        %v1403 = vadd.f32 %v1338, %v1402
        %v1404 = vpop.f32.mrb[0].mxu0
        %1405 = vdwg.mxu0
        %v1406 = vadd.f32 %v996, %v1376
        %v1407 = vadd.f32 %v997, %v1379
        %v1408 = vadd.f32 %v998, %v1384
        %v1409 = vadd.f32 %v999, %v1387
        %v1410 = vadd.f32 %v1000, %v1392
        %v1411 = vadd.f32 %v1001, %v1395
        %v1412 = vadd.f32 %v1002, %v1400
        %v1413 = vadd.f32 %v1003, %v1403
        %1414 = vst [vmem:[#allocation2] sm:$0xff] %v1406
        %1415 = vst [vmem:[#allocation2 + $0x8] sm:$0xff] %v1407
        %1416 = vst [vmem:[#allocation2 + $0x10] sm:$0xff] %v1408
        %1417 = vst [vmem:[#allocation2 + $0x18] sm:$0xff] %v1409
        %1418 = vst [vmem:[#allocation2 + $0x20] sm:$0xff] %v1410
        %1419 = vst [vmem:[#allocation2 + $0x28] sm:$0xff] %v1411
        %1420 = vst [vmem:[#allocation2 + $0x30] sm:$0xff] %v1412
        %1421 = vst [vmem:[#allocation2 + $0x38] sm:$0xff] %v1413
        // Predicated region
        $region57: #{tpu_custom_call.1} parent=39 // pred_check
          %p1422 = pneg %p324
        $region58: #{tpu_custom_call.1} parent=39 // pred_check_branch
          %1424 = sbr.rel (%p1422) target = $region60
        $region59: #{tpu_custom_call.1} parent=39 // pred_region
          %v1425 = vld [vmem:[#allocation2] sm:$0xff]
          %v1426 = vld [vmem:[#allocation2 + $0x8] sm:$0xff]
          %v1427 = vld [vmem:[#allocation2 + $0x10] sm:$0xff]
          %v1428 = vld [vmem:[#allocation2 + $0x18] sm:$0xff]
          %v1429 = vld [vmem:[#allocation2 + $0x20] sm:$0xff]
          %v1430 = vld [vmem:[#allocation2 + $0x28] sm:$0xff]
          %v1431 = vld [vmem:[#allocation2 + $0x30] sm:$0xff]
          %v1432 = vld [vmem:[#allocation2 + $0x38] sm:$0xff]
          %v1433 = vld [vmem:[%s4] sm:$0x1]
          %v1435 = vlaneseq
          %v1436 = vshrl.u32 %v1435, 7
          %v1437 = vsub.s32 0, %v1436
          %v1438 = vrot.slane %v1433, %v1437
          %v1440 = vadd.f32 %v1425, %v1438
          %v1441 = vadd.f32 %v1426, %v1438
          %v1442 = vadd.f32 %v1427, %v1438
          %v1443 = vadd.f32 %v1428, %v1438
          %v1444 = vadd.f32 %v1429, %v1438
          %v1445 = vadd.f32 %v1430, %v1438
          %v1446 = vadd.f32 %v1431, %v1438
          %v1447 = vadd.f32 %v1432, %v1438
          %1448 = vst [vmem:[%s313] sm:$0xff] %v1440
          %1449 = vst [vmem:[%s313 + $0x8] sm:$0xff] %v1441
          %1450 = vst [vmem:[%s313 + $0x10] sm:$0xff] %v1442
          %1451 = vst [vmem:[%s313 + $0x18] sm:$0xff] %v1443
          %1452 = vst [vmem:[%s313 + $0x20] sm:$0xff] %v1444
          %1453 = vst [vmem:[%s313 + $0x28] sm:$0xff] %v1445
          %1454 = vst [vmem:[%s313 + $0x30] sm:$0xff] %v1446
          %1455 = vst [vmem:[%s313 + $0x38] sm:$0xff] %v1447
        $region60: #{tpu_custom_call.1} parent=39 // pred_fallthru
          _
        %s1456 = sand.u32 %s168, 1
        %s1457 = scalar_lea.sflag [#allocation5], %s1456
        %s1458 = sand.u32 %s168, 1
        %s1459 = smul.addr %s1458, 64
        %s1460 = scalar_lea.vmem [#allocation9], %s1459
        // Predicated region
        $region61: #{tpu_custom_call.1} parent=39 // pred_check
          %p1461 = pneg %p178
        $region62: #{tpu_custom_call.1} parent=39 // pred_check_branch
          %1463 = sbr.rel (%p1461) target = $region64
        $region63: #{tpu_custom_call.1} parent=39 // pred_region
          %s1464 = smul.u32 8, %s27
          %s1466 = ssub.s32 1024, 1024
          %1467 = vsyncadd %s1457, %s1466
          %s1468 = smul.addr %s1464, 128
          %s1469 = scalar_lea.hbm %s5, %s1468
          %s1470 = sshll.u32 %s1460, 4
          %s1471 = int_to_ptr.vmem [resolvable:$true] %s1470
          %1476 = dma.vmem_to_hbm [thread:$0]  %s1471, 1024, %s1469, %s1457, 128, 128, 8
        $region64: #{tpu_custom_call.1} parent=39 // pred_fallthru
          _
      $region40: #{tpu_custom_call.1} parent=5 // pred_fallthru
        _
      %p1477 = scmp.le.s32.totalorder 2, %s18
      // Predicated region
      $region65: #{tpu_custom_call.1} parent=5 // pred_check
        %p1478 = pneg %p1477
      $region66: #{tpu_custom_call.1} parent=5 // pred_check_branch
        %1480 = sbr.rel (%p1478) target = $region68
      $region67: #{tpu_custom_call.1} parent=5 // pred_region
        %s1481 = ssub.s32 %s18, 2
        // Predicated region
        $region69: #{tpu_custom_call.1} parent=67 // pred_check
          %p1482 = pneg %p184
        $region70: #{tpu_custom_call.1} parent=67 // pred_check_branch
          %1484 = sbr.rel (%p1482) target = $region72
        $region71: #{tpu_custom_call.1} parent=67 // pred_region
          %s1485 = sand.u32 %s169, 1
          %s1486 = scalar_lea.sflag [#allocation5], %s1485
          %s1487 = sand.u32 %s169, 1
          %s1488 = smul.addr %s1487, 64
          %s1489 = scalar_lea.vmem [#allocation9], %s1488
          %1490 = dma.done %s1486, 1024
        $region72: #{tpu_custom_call.1} parent=67 // pred_fallthru
          _
      $region68: #{tpu_custom_call.1} parent=5 // pred_fallthru
        _
    $region6: #{tpu_custom_call.1} parent=1 // loop_footer
      %s22 = sadd.s32 1, %s18
    $region7: #{tpu_custom_call.1} parent=1 // loop_footer_branch
      %17 = sbr.rel target = $region3
    $region8: #{tpu_custom_call.1} parent=1 // loop_exit
      _
    %1491 = vsyncpa [#allocation4], 1
    %s1492 = scalar_lea.sflag [#allocation4], 1
    %1493 = vsyncpa %s1492, 1
    %1494 = vsyncpa [#allocation7], 1
    %1495 = vsyncpa [#allocation5], 1
    %s1496 = scalar_lea.sflag [#allocation5], 1
    %1497 = vsyncpa %s1496, 1

// kernel: tpu_custom_call.1
$region0: #{tpu_custom_call.1}
  #allocation0 [shape = 'u32[]', space=smem, size = 0x4, offset = 0x4, fixed_abs, tag = 'smem constant byte address 0x4 - core index']
  #allocation1 [shape = 'u32[144,128]{1,0:T(1,128)}', space=vmem, size = 0x12000, scoped, tag = 'internal scratch']
  #allocation2 [shape = 'f32[64,128]{1,0:T(8,128)}', space=vmem, size = 0x8000, scoped, tag = 'scratch operand']
  %s0 = inlined_call_operand.hbm [shape: f32[128,128], index: 0, kind: input, shape index: {}]
  %s1 = inlined_call_operand.hbm [shape: bf16[128,512], index: 1, kind: input, shape index: {}]
  %s2 = inlined_call_operand.vmem [shape: f32[1,512], index: 2, kind: input, shape index: {}]
  %s3 = inlined_call_operand.hbm [shape: bf16[512,128], index: 3, kind: input, shape index: {}]
  %s4 = inlined_call_operand.vmem [shape: f32[1,128], index: 4, kind: input, shape index: {}]
  %s5 = inlined_call_operand.hbm [shape: f32[128,128], index: 5, kind: output, shape index: {}]
  %s6 = sld [smem:[#allocation0]]
  $region73: #{tpu_custom_call.1} parent=0
    _
  %s8 = ssub.s32 1, %s6
  %s9 = scalar_select 0, %s8, %s6
  $region1: #{tpu_custom_call.1} parent=0
    #allocation3 [shape = 'u8[65536]{0}', space=vmem, size = 0x10000, scoped, tag = 'input window, operand 0']
    #allocation4 [shape = 's32[2]{0}', space=sflag, size = 0x8, scoped, tag = 'scoped memory for tpu_custom_call.1']
    #allocation5 [shape = 's32[2]{0}', space=sflag, size = 0x8, scoped, tag = 'scoped memory for tpu_custom_call.1']
    #allocation6 [shape = 'u8[131072]{0}', space=vmem, size = 0x20000, scoped, tag = 'input window, operand 1, single buffered']
    #allocation7 [shape = 's32[1]{0}', space=sflag, size = 0x4, scoped, tag = 'scoped memory for tpu_custom_call.1']
    #allocation8 [shape = 'u8[131072]{0}', space=vmem, size = 0x20000, scoped, tag = 'input window, operand 3, single buffered']
    #allocation9 [shape = 'u8[65536]{0}', space=vmem, size = 0x10000, scoped, tag = 'output window, operand 0']
    %10 = vsyncpa [#allocation4], 0
    %s11 = scalar_lea.sflag [#allocation4], 1
    %12 = vsyncpa %s11, 0
    %13 = vsyncpa [#allocation7], 0
    %14 = vsyncpa [#allocation5], 0
    %s15 = scalar_lea.sflag [#allocation5], 1
    %16 = vsyncpa %s15, 0
    loop: start=0, step=1, limit=4
    $region2: #{tpu_custom_call.1} parent=1 // loop_pre_header
      _
    $region3: #{tpu_custom_call.1} parent=1 // loop_header
      %s18 = sphi 0, %s22
      %p19 = scmp.ge.s32.totalorder %s18, 4
      %s25 = sphi 0, %s37
      %s26 = sphi 0, %s33
      %s27 = sphi 0, %s25
      %s28 = sphi 0, %s26
      %s29 = sphi 0, %s27
      %s30 = sphi 0, %s28
      %s40 = sphi 0, %s42
      %s43 = sphi 0, %s40
      %s44 = sphi 0, %s43
      %s60 = sphi 0, %s44
      %s66 = sphi 0, %s68
      %s69 = sphi 0, %s66
      %s70 = sphi 0, %s69
      %s86 = sphi 0, %s70
      %s92 = sphi 0, %s94
      %s95 = sphi 0, %s92
      %s96 = sphi 0, %s95
      %s112 = sphi 0, %s96
      %s118 = sphi 0, %s120
      %s121 = sphi 0, %s118
      %s122 = sphi 0, %s121
      %s138 = sphi 0, %s122
      %s142 = sphi 0, %s142
      %s144 = sphi 0, %s142
      %s145 = sphi 0, %s144
      %s159 = sphi 0, %s145
      %s165 = sphi 0, %s167
      %s168 = sphi 0, %s165
      %s169 = sphi 0, %s168
      %s185 = sphi 0, %s169
    $region4: #{tpu_custom_call.1} parent=1 // loop_header_branch
      %21 = sbr.rel (%p19) target = $region8
    $region5: #{tpu_custom_call.1} parent=1 // loop_body
      %s23 = ssub.s32 %s18, 1
      %s24 = ssub.s32 %s18, 2
      %s31 = sadd.s32 1, %s26
      %p32 = scmp.ge.s32.totalorder %s31, 1
      %s33 = scalar_select %p32, 0, %s31
      %s34 = sadd.s32 1, %s25
      %s35 = scalar_select %p32, %s34, %s25
      %p36 = scmp.ge.s32.totalorder %s35, 2
      %s37 = scalar_select %p36, 0, %s35
      %s38 = ssub.s32 %s25, %s37
      %p39 = scmp.eq.s32.totalorder %s38, 0
      %s41 = sadd.s32 %s40, 1
      %s42 = scalar_select %p39, %s40, %s41
      %p45 = pneg %p39
      %p46 = scmp.eq.s32.totalorder %s18, 1
      %p47 = por %p45, %p46
      %p48 = scmp.ne.s32.totalorder %s40, %s43
      %p49 = scmp.eq.s32.totalorder %s18, 0
      %p50 = por %p48, %p49
      %p51 = scmp.ne.s32.totalorder %s40, %s43
      %p52 = scmp.eq.s32.totalorder %s23, 1
      %p53 = por %p51, %p52
      %p54 = scmp.ne.s32.totalorder %s43, %s44
      %p55 = scmp.eq.s32.totalorder %s23, 0
      %p56 = por %p54, %p55
      %p57 = scmp.ne.s32.totalorder %s43, %s44
      %p58 = scmp.eq.s32.totalorder %s24, 1
      %p59 = por %p57, %p58
      %p61 = scmp.ne.s32.totalorder %s44, %s60
      %p62 = scmp.eq.s32.totalorder %s24, 0
      %p63 = por %p61, %p62
      %s64 = ssub.s32 %s26, %s33
      %p65 = scmp.eq.s32.totalorder %s64, 0
      %s67 = sadd.s32 %s66, 1
      %s68 = scalar_select %p65, %s66, %s67
      %p71 = pneg %p65
      %p72 = scmp.eq.s32.totalorder %s18, 1
      %p73 = por %p71, %p72
      %p74 = scmp.ne.s32.totalorder %s66, %s69
      %p75 = scmp.eq.s32.totalorder %s18, 0
      %p76 = por %p74, %p75
      %p77 = scmp.ne.s32.totalorder %s66, %s69
      %p78 = scmp.eq.s32.totalorder %s23, 1
      %p79 = por %p77, %p78
      %p80 = scmp.ne.s32.totalorder %s69, %s70
      %p81 = scmp.eq.s32.totalorder %s23, 0
      %p82 = por %p80, %p81
      %p83 = scmp.ne.s32.totalorder %s69, %s70
      %p84 = scmp.eq.s32.totalorder %s24, 1
      %p85 = por %p83, %p84
      %p87 = scmp.ne.s32.totalorder %s70, %s86
      %p88 = scmp.eq.s32.totalorder %s24, 0
      %p89 = por %p87, %p88
      %s90 = ssub.s32 %s26, %s33
      %p91 = scmp.eq.s32.totalorder %s90, 0
      %s93 = sadd.s32 %s92, 1
      %s94 = scalar_select %p91, %s92, %s93
      %p97 = pneg %p91
      %p98 = scmp.eq.s32.totalorder %s18, 1
      %p99 = por %p97, %p98
      %p100 = scmp.ne.s32.totalorder %s92, %s95
      %p101 = scmp.eq.s32.totalorder %s18, 0
      %p102 = por %p100, %p101
      %p103 = scmp.ne.s32.totalorder %s92, %s95
      %p104 = scmp.eq.s32.totalorder %s23, 1
      %p105 = por %p103, %p104
      %p106 = scmp.ne.s32.totalorder %s95, %s96
      %p107 = scmp.eq.s32.totalorder %s23, 0
      %p108 = por %p106, %p107
      %p109 = scmp.ne.s32.totalorder %s95, %s96
      %p110 = scmp.eq.s32.totalorder %s24, 1
      %p111 = por %p109, %p110
      %p113 = scmp.ne.s32.totalorder %s96, %s112
      %p114 = scmp.eq.s32.totalorder %s24, 0
      %p115 = por %p113, %p114
      %s116 = ssub.s32 %s26, %s33
      %p117 = scmp.eq.s32.totalorder %s116, 0
      %s119 = sadd.s32 %s118, 1
      %s120 = scalar_select %p117, %s118, %s119
      %p123 = pneg %p117
      %p124 = scmp.eq.s32.totalorder %s18, 1
      %p125 = por %p123, %p124
      %p126 = scmp.ne.s32.totalorder %s118, %s121
      %p127 = scmp.eq.s32.totalorder %s18, 0
      %p128 = por %p126, %p127
      %p129 = scmp.ne.s32.totalorder %s118, %s121
      %p130 = scmp.eq.s32.totalorder %s23, 1
      %p131 = por %p129, %p130
      %p132 = scmp.ne.s32.totalorder %s121, %s122
      %p133 = scmp.eq.s32.totalorder %s23, 0
      %p134 = por %p132, %p133
      %p135 = scmp.ne.s32.totalorder %s121, %s122
      %p136 = scmp.eq.s32.totalorder %s24, 1
      %p137 = por %p135, %p136
      %p139 = scmp.ne.s32.totalorder %s122, %s138
      %p140 = scmp.eq.s32.totalorder %s24, 0
      %p141 = por %p139, %p140
      %s143 = sadd.s32 %s142, 1
      %p146 = scmp.eq.s32.totalorder %s18, 1
      %p147 = scmp.ne.s32.totalorder %s142, %s144
      %p148 = scmp.eq.s32.totalorder %s18, 0
      %p149 = por %p147, %p148
      %p150 = scmp.ne.s32.totalorder %s142, %s144
      %p151 = scmp.eq.s32.totalorder %s23, 1
      %p152 = por %p150, %p151
      %p153 = scmp.ne.s32.totalorder %s144, %s145
      %p154 = scmp.eq.s32.totalorder %s23, 0
      %p155 = por %p153, %p154
      %p156 = scmp.ne.s32.totalorder %s144, %s145
      %p157 = scmp.eq.s32.totalorder %s24, 1
      %p158 = por %p156, %p157
      %p160 = scmp.ne.s32.totalorder %s145, %s159
      %p161 = scmp.eq.s32.totalorder %s24, 0
      %p162 = por %p160, %p161
      %s163 = ssub.s32 %s25, %s37
      %p164 = scmp.eq.s32.totalorder %s163, 0
      %s166 = sadd.s32 %s165, 1
      %s167 = scalar_select %p164, %s165, %s166
      %p170 = pneg %p164
      %p171 = scmp.eq.s32.totalorder %s18, 1
      %p172 = por %p170, %p171
      %p173 = scmp.ne.s32.totalorder %s165, %s168
      %p174 = scmp.eq.s32.totalorder %s18, 0
      %p175 = por %p173, %p174
      %p176 = scmp.ne.s32.totalorder %s165, %s168
      %p177 = scmp.eq.s32.totalorder %s23, 1
      %p178 = por %p176, %p177
      %p179 = scmp.ne.s32.totalorder %s168, %s169
      %p180 = scmp.eq.s32.totalorder %s23, 0
      %p181 = por %p179, %p180
      %p182 = scmp.ne.s32.totalorder %s168, %s169
      %p183 = scmp.eq.s32.totalorder %s24, 1
      %p184 = por %p182, %p183
      %p186 = scmp.ne.s32.totalorder %s169, %s185
      %p187 = scmp.eq.s32.totalorder %s24, 0
      %p188 = por %p186, %p187
      %p189 = scmp.le.s32.totalorder 1, %s18
      %p190 = scmp.lt.s32.totalorder %s18, 3
      %p191 = pnand %p189, %p190
      %p192 = pneg %p191
      // Predicated region
      $region9: #{tpu_custom_call.1} parent=5 // pred_check
        _
      $region10: #{tpu_custom_call.1} parent=5 // pred_check_branch
        %194 = sbr.rel (%p191) target = $region12
      $region11: #{tpu_custom_call.1} parent=5 // pred_region
        %s195 = ssub.s32 %s18, 1
        // Predicated region
        $region13: #{tpu_custom_call.1} parent=11 // pred_check
          %p196 = pneg %p82
        $region14: #{tpu_custom_call.1} parent=11 // pred_check_branch
          %198 = sbr.rel (%p196) target = $region16
        $region15: #{tpu_custom_call.1} parent=11 // pred_region
          %s199 = smul.u32 4, %s28
          %s201 = ssub.s32 4096, 4096
          %202 = vsyncadd [#allocation7], %s201
          %s203 = smul.addr %s199, 64
          %s204 = scalar_lea.hbm %s1, %s203
          %s205 = sshll.u32 [#allocation6], 4
          %s206 = int_to_ptr.vmem [resolvable:$true] %s205
          %211 = dma.hbm_to_vmem [thread:$0]  %s204, 4096, %s206, [#allocation7], 256, 256, 16
        $region16: #{tpu_custom_call.1} parent=11 // pred_fallthru
          _
        // Predicated region
        $region17: #{tpu_custom_call.1} parent=11 // pred_check
          %p212 = pneg %p108
        $region18: #{tpu_custom_call.1} parent=11 // pred_check_branch
          %214 = sbr.rel (%p212) target = $region20
        $region19: #{tpu_custom_call.1} parent=11 // pred_region
          %s215 = smul.u32 4, %s28
          %p216 = scmp.lt.s32.totalorder %s215, 3
          %s217 = scalar_select %p216, %s215, 3
          %s218 = scalar_lea.vmem %s2, %s217
          %s219 = smul.u32 4, %s28
        $region20: #{tpu_custom_call.1} parent=11 // pred_fallthru
          _
        // Predicated region
        $region21: #{tpu_custom_call.1} parent=11 // pred_check
          %p220 = pneg %p134
        $region22: #{tpu_custom_call.1} parent=11 // pred_check_branch
          %222 = sbr.rel (%p220) target = $region24
        $region23: #{tpu_custom_call.1} parent=11 // pred_region
          %s223 = smul.u32 64, %s28
          %s225 = ssub.s32 4096, 4096
          %226 = vsyncadd [#allocation7], %s225
          %s227 = smul.addr %s223, 64
          %s228 = scalar_lea.hbm %s3, %s227
          %s229 = sshll.u32 [#allocation8], 4
          %s230 = int_to_ptr.vmem [resolvable:$true] %s229
          %235 = dma.hbm_to_vmem [thread:$0]  %s228, 4096, %s230, [#allocation7], 64, 64, 4
        $region24: #{tpu_custom_call.1} parent=11 // pred_fallthru
          _
        // Predicated region
        $region25: #{tpu_custom_call.1} parent=11 // pred_check
          %p236 = pneg %p155
        $region26: #{tpu_custom_call.1} parent=11 // pred_check_branch
          %238 = sbr.rel (%p236) target = $region28
        $region27: #{tpu_custom_call.1} parent=11 // pred_region
          _
        $region28: #{tpu_custom_call.1} parent=11 // pred_fallthru
          _
      $region12: #{tpu_custom_call.1} parent=5 // pred_fallthru
        _
      %p239 = scmp.lt.s32.totalorder %s18, 2
      // Predicated region
      $region29: #{tpu_custom_call.1} parent=5 // pred_check
        %p240 = pneg %p239
      $region30: #{tpu_custom_call.1} parent=5 // pred_check_branch
        %242 = sbr.rel (%p240) target = $region32
      $region31: #{tpu_custom_call.1} parent=5 // pred_region
        // Predicated region
        $region33: #{tpu_custom_call.1} parent=31 // pred_check
          %p243 = pneg %p50
        $region34: #{tpu_custom_call.1} parent=31 // pred_check_branch
          %245 = sbr.rel (%p243) target = $region36
        $region35: #{tpu_custom_call.1} parent=31 // pred_region
          %s246 = sand.u32 %s40, 1
          %s247 = scalar_lea.sflag [#allocation4], %s246
          %s248 = sand.u32 %s40, 1
          %s249 = smul.addr %s248, 64
          %s250 = scalar_lea.vmem [#allocation3], %s249
          %s251 = smul.u32 8, %s25
          %s253 = ssub.s32 1024, 1024
          %254 = vsyncadd %s247, %s253
          %s255 = smul.addr %s251, 128
          %s256 = scalar_lea.hbm %s0, %s255
          %s257 = sshll.u32 %s250, 4
          %s258 = int_to_ptr.vmem [resolvable:$true] %s257
          %263 = dma.hbm_to_vmem [thread:$0]  %s256, 1024, %s258, %s247, 128, 128, 8
        $region36: #{tpu_custom_call.1} parent=31 // pred_fallthru
          _
      $region32: #{tpu_custom_call.1} parent=5 // pred_fallthru
        _
      %p264 = scmp.le.s32.totalorder 1, %s18
      %p265 = scmp.lt.s32.totalorder %s18, 3
      %p266 = pnand %p264, %p265
      %p267 = pneg %p266
      // Predicated region
      $region37: #{tpu_custom_call.1} parent=5 // pred_check
        _
      $region38: #{tpu_custom_call.1} parent=5 // pred_check_branch
        %269 = sbr.rel (%p266) target = $region40
      $region39: #{tpu_custom_call.1} parent=5 // pred_region
        %s270 = ssub.s32 %s18, 1
        %s271 = sand.u32 %s43, 1
        %s272 = scalar_lea.sflag [#allocation4], %s271
        %s273 = sand.u32 %s43, 1
        %s274 = smul.addr %s273, 64
        %s275 = scalar_lea.vmem [#allocation3], %s274
        // Predicated region
        $region41: #{tpu_custom_call.1} parent=39 // pred_check
          %p276 = pneg %p56
        $region42: #{tpu_custom_call.1} parent=39 // pred_check_branch
          %278 = sbr.rel (%p276) target = $region44
        $region43: #{tpu_custom_call.1} parent=39 // pred_region
          %279 = dma.done %s272, 1024
        $region44: #{tpu_custom_call.1} parent=39 // pred_fallthru
          _
        // Predicated region
        $region45: #{tpu_custom_call.1} parent=39 // pred_check
          %p280 = pneg %p82
        $region46: #{tpu_custom_call.1} parent=39 // pred_check_branch
          %282 = sbr.rel (%p280) target = $region48
        $region47: #{tpu_custom_call.1} parent=39 // pred_region
          %283 = dma.done [#allocation7], 4096
        $region48: #{tpu_custom_call.1} parent=39 // pred_fallthru
          _
        // Predicated region
        $region49: #{tpu_custom_call.1} parent=39 // pred_check
          %p284 = pneg %p134
        $region50: #{tpu_custom_call.1} parent=39 // pred_check_branch
          %286 = sbr.rel (%p284) target = $region52
        $region51: #{tpu_custom_call.1} parent=39 // pred_region
          %287 = dma.done [#allocation7], 4096
        $region52: #{tpu_custom_call.1} parent=39 // pred_fallthru
          _
        %s288 = sand.u32 %s43, 1
        %s289 = scalar_lea.sflag [#allocation4], %s288
        %s290 = sand.u32 %s43, 1
        %s291 = smul.addr %s290, 64
        %s292 = scalar_lea.vmem [#allocation3], %s291
        %p293 = pneg %p56
        %p294 = pneg %p53
        %p295 = pneg %p82
        %p296 = pneg %p79
        %s297 = smul.u32 4, %s28
        %p298 = scmp.lt.s32.totalorder %s297, 3
        %s299 = scalar_select %p298, %s297, 3
        %s300 = scalar_lea.vmem %s2, %s299
        %p301 = pneg %p108
        %p302 = pneg %p105
        %p303 = pneg %p134
        %p304 = pneg %p131
        %p305 = pneg %p155
        %p306 = pneg %p152
        %p307 = pneg %p181
        %p308 = pneg %p178
        %s309 = sand.u32 %s168, 1
        %s310 = scalar_lea.sflag [#allocation5], %s309
        %s311 = sand.u32 %s168, 1
        %s312 = smul.addr %s311, 64
        %s313 = scalar_lea.vmem [#allocation9], %s312
        %s314 = smul.u32 8, %s27
        %s315 = smul.u32 4, %s28
        %s316 = smul.u32 4, %s28
        %p317 = scmp.lt.s32.totalorder %s316, 3
        %s318 = scalar_select %p317, %s316, 3
        %s319 = scalar_lea.vmem %s2, %s318
        %s320 = smul.u32 4, %s28
        %s321 = smul.u32 64, %s28
        %s322 = smul.u32 8, %s27
        %p324 = scmp.eq.s32.totalorder %s28, 0
        // Predicated region
        $region53: #{tpu_custom_call.1} parent=39 // pred_check
          %p325 = pneg %p324
        $region54: #{tpu_custom_call.1} parent=39 // pred_check_branch
          %327 = sbr.rel (%p325) target = $region56
        $region55: #{tpu_custom_call.1} parent=39 // pred_region
          %328 = vst [vmem:[#allocation2] sm:$0xff] 0.0
          %329 = vst [vmem:[#allocation2 + $0x8] sm:$0xff] 0.0
          %330 = vst [vmem:[#allocation2 + $0x10] sm:$0xff] 0.0
          %331 = vst [vmem:[#allocation2 + $0x18] sm:$0xff] 0.0
          %332 = vst [vmem:[#allocation2 + $0x20] sm:$0xff] 0.0
          %333 = vst [vmem:[#allocation2 + $0x28] sm:$0xff] 0.0
          %334 = vst [vmem:[#allocation2 + $0x30] sm:$0xff] 0.0
          %335 = vst [vmem:[#allocation2 + $0x38] sm:$0xff] 0.0
        $region56: #{tpu_custom_call.1} parent=39 // pred_fallthru
          _
        %v336 = vld [vmem:[%s275] sm:$0xff]
        %v337 = vld [vmem:[%s275 + $0x8] sm:$0xff]
        %v338 = vld [vmem:[%s275 + $0x10] sm:$0xff]
        %v339 = vld [vmem:[%s275 + $0x18] sm:$0xff]
        %v340 = vld [vmem:[%s275 + $0x20] sm:$0xff]
        %v341 = vld [vmem:[%s275 + $0x28] sm:$0xff]
        %v342 = vld [vmem:[%s275 + $0x30] sm:$0xff]
        %v343 = vld [vmem:[%s275 + $0x38] sm:$0xff]
        %v344 = vpack.c.bf16 %v337, %v336
        %v345 = vpack.c.bf16 %v339, %v338
        %v346 = vpack.c.bf16 %v341, %v340
        %v347 = vpack.c.bf16 %v343, %v342
        %v348 = vld [vmem:[#allocation6] sm:$0xff]
        %v349 = vld [vmem:[#allocation6 + $0x8] sm:$0xff]
        %v350 = vld [vmem:[#allocation6 + $0x10] sm:$0xff]
        %v351 = vld [vmem:[#allocation6 + $0x18] sm:$0xff]
        %v352 = vld [vmem:[#allocation6 + $0x20] sm:$0xff]
        %v353 = vld [vmem:[#allocation6 + $0x28] sm:$0xff]
        %v354 = vld [vmem:[#allocation6 + $0x30] sm:$0xff]
        %v355 = vld [vmem:[#allocation6 + $0x38] sm:$0xff]
        %v356 = vld [vmem:[#allocation6 + $0x40] sm:$0xff]
        %v357 = vld [vmem:[#allocation6 + $0x48] sm:$0xff]
        %v358 = vld [vmem:[#allocation6 + $0x50] sm:$0xff]
        %v359 = vld [vmem:[#allocation6 + $0x58] sm:$0xff]
        %v360 = vld [vmem:[#allocation6 + $0x60] sm:$0xff]
        %v361 = vld [vmem:[#allocation6 + $0x68] sm:$0xff]
        %v362 = vld [vmem:[#allocation6 + $0x70] sm:$0xff]
        %v363 = vld [vmem:[#allocation6 + $0x78] sm:$0xff]
        %v364 = vld [vmem:[#allocation6 + $0x80] sm:$0xff]
        %v365 = vld [vmem:[#allocation6 + $0x88] sm:$0xff]
        %v366 = vld [vmem:[#allocation6 + $0x90] sm:$0xff]
        %v367 = vld [vmem:[#allocation6 + $0x98] sm:$0xff]
        %v368 = vld [vmem:[#allocation6 + $0xa0] sm:$0xff]
        %v369 = vld [vmem:[#allocation6 + $0xa8] sm:$0xff]
        %v370 = vld [vmem:[#allocation6 + $0xb0] sm:$0xff]
        %v371 = vld [vmem:[#allocation6 + $0xb8] sm:$0xff]
        %v372 = vld [vmem:[#allocation6 + $0xc0] sm:$0xff]
        %v373 = vld [vmem:[#allocation6 + $0xc8] sm:$0xff]
        %v374 = vld [vmem:[#allocation6 + $0xd0] sm:$0xff]
        %v375 = vld [vmem:[#allocation6 + $0xd8] sm:$0xff]
        %v376 = vld [vmem:[#allocation6 + $0xe0] sm:$0xff]
        %v377 = vld [vmem:[#allocation6 + $0xe8] sm:$0xff]
        %v378 = vld [vmem:[#allocation6 + $0xf0] sm:$0xff]
        %v379 = vld [vmem:[#allocation6 + $0xf8] sm:$0xff]
        %v380 = vld [vmem:[%s319] sm:$0xf]
        %v382 = vlaneseq
        %v383 = vshrl.u32 %v382, 7
        %v384 = vsub.s32 0, %v383
        %v385 = vrot.slane %v380, %v384
        %v386 = vlaneseq
        %v387 = vshrl.u32 %v386, 7
        %v388 = vsub.s32 1, %v387
        %v389 = vrot.slane %v380, %v388
        %v390 = vlaneseq
        %v391 = vshrl.u32 %v390, 7
        %v392 = vsub.s32 2, %v391
        %v393 = vrot.slane %v380, %v392
        %v394 = vlaneseq
        %v395 = vshrl.u32 %v394, 7
        %v396 = vsub.s32 3, %v395
        %v397 = vrot.slane %v380, %v396
        %v434 = vunpack.c.l.b16 %v348
        %v435 = vunpack.c.h.b16 %v348
        %v436 = vunpack.c.l.b16 %v349
        %v437 = vunpack.c.h.b16 %v349
        %v438 = vunpack.c.l.b16 %v350
        %v439 = vunpack.c.h.b16 %v350
        %v440 = vunpack.c.l.b16 %v351
        %v441 = vunpack.c.h.b16 %v351
        %v442 = vunpack.c.l.b16 %v352
        %v443 = vunpack.c.h.b16 %v352
        %v444 = vunpack.c.l.b16 %v353
        %v445 = vunpack.c.h.b16 %v353
        %v446 = vunpack.c.l.b16 %v354
        %v447 = vunpack.c.h.b16 %v354
        %v448 = vunpack.c.l.b16 %v355
        %v449 = vunpack.c.h.b16 %v355
        %v450 = vunpack.c.l.b16 %v356
        %v451 = vunpack.c.h.b16 %v356
        %v452 = vunpack.c.l.b16 %v357
        %v453 = vunpack.c.h.b16 %v357
        %v454 = vunpack.c.l.b16 %v358
        %v455 = vunpack.c.h.b16 %v358
        %v456 = vunpack.c.l.b16 %v359
        %v457 = vunpack.c.h.b16 %v359
        %v458 = vunpack.c.l.b16 %v360
        %v459 = vunpack.c.h.b16 %v360
        %v460 = vunpack.c.l.b16 %v361
        %v461 = vunpack.c.h.b16 %v361
        %v462 = vunpack.c.l.b16 %v362
        %v463 = vunpack.c.h.b16 %v362
        %v464 = vunpack.c.l.b16 %v363
        %v465 = vunpack.c.h.b16 %v363
        %v466 = vunpack.c.l.b16 %v364
        %v467 = vunpack.c.h.b16 %v364
        %v468 = vunpack.c.l.b16 %v365
        %v469 = vunpack.c.h.b16 %v365
        %v470 = vunpack.c.l.b16 %v366
        %v471 = vunpack.c.h.b16 %v366
        %v472 = vunpack.c.l.b16 %v367
        %v473 = vunpack.c.h.b16 %v367
        %v474 = vunpack.c.l.b16 %v368
        %v475 = vunpack.c.h.b16 %v368
        %v476 = vunpack.c.l.b16 %v369
        %v477 = vunpack.c.h.b16 %v369
        %v478 = vunpack.c.l.b16 %v370
        %v479 = vunpack.c.h.b16 %v370
        %v480 = vunpack.c.l.b16 %v371
        %v481 = vunpack.c.h.b16 %v371
        %v482 = vunpack.c.l.b16 %v372
        %v483 = vunpack.c.h.b16 %v372
        %v484 = vunpack.c.l.b16 %v373
        %v485 = vunpack.c.h.b16 %v373
        %v486 = vunpack.c.l.b16 %v374
        %v487 = vunpack.c.h.b16 %v374
        %v488 = vunpack.c.l.b16 %v375
        %v489 = vunpack.c.h.b16 %v375
        %v490 = vunpack.c.l.b16 %v376
        %v491 = vunpack.c.h.b16 %v376
        %v492 = vunpack.c.l.b16 %v377
        %v493 = vunpack.c.h.b16 %v377
        %v494 = vunpack.c.l.b16 %v378
        %v495 = vunpack.c.h.b16 %v378
        %v496 = vunpack.c.l.b16 %v379
        %v497 = vunpack.c.h.b16 %v379
        %v498 = vpack.c.b16 %v438, %v434
        %v499 = vpack.c.b16 %v439, %v435
        %v500 = vpack.c.b16 %v440, %v436
        %v501 = vpack.c.b16 %v441, %v437
        %v502 = vpack.c.b16 %v446, %v442
        %v503 = vpack.c.b16 %v447, %v443
        %v504 = vpack.c.b16 %v448, %v444
        %v505 = vpack.c.b16 %v449, %v445
        %v506 = vpack.c.b16 %v454, %v450
        %v507 = vpack.c.b16 %v455, %v451
        %v508 = vpack.c.b16 %v456, %v452
        %v509 = vpack.c.b16 %v457, %v453
        %v510 = vpack.c.b16 %v462, %v458
        %v511 = vpack.c.b16 %v463, %v459
        %v512 = vpack.c.b16 %v464, %v460
        %v513 = vpack.c.b16 %v465, %v461
        %v514 = vpack.c.b16 %v470, %v466
        %v515 = vpack.c.b16 %v471, %v467
        %v516 = vpack.c.b16 %v472, %v468
        %v517 = vpack.c.b16 %v473, %v469
        %v518 = vpack.c.b16 %v478, %v474
        %v519 = vpack.c.b16 %v479, %v475
        %v520 = vpack.c.b16 %v480, %v476
        %v521 = vpack.c.b16 %v481, %v477
        %v522 = vpack.c.b16 %v486, %v482
        %v523 = vpack.c.b16 %v487, %v483
        %v524 = vpack.c.b16 %v488, %v484
        %v525 = vpack.c.b16 %v489, %v485
        %v526 = vpack.c.b16 %v494, %v490
        %v527 = vpack.c.b16 %v495, %v491
        %v528 = vpack.c.b16 %v496, %v492
        %v529 = vpack.c.b16 %v497, %v493
        %562 = vmatprep.subr.bf16.mxu0 %v499
        %563 = vmatpush1.bf16.msra.mxu0 %v498
        %564 = vmatprep.subr.bf16.mxu0 %v503
        %565 = vmatpush1.bf16.msra.mxu0 %v502
        %566 = vmatprep.subr.bf16.mxu0 %v507
        %567 = vmatpush1.bf16.msra.mxu0 %v506
        %568 = vmatprep.subr.bf16.mxu0 %v511
        %569 = vmatpush1.bf16.msra.mxu0 %v510
        %570 = vmatprep.subr.bf16.mxu0 %v515
        %571 = vmatpush1.bf16.msra.mxu0 %v514
        %572 = vmatprep.subr.bf16.mxu0 %v519
        %573 = vmatpush1.bf16.msra.mxu0 %v518
        %574 = vmatprep.subr.bf16.mxu0 %v523
        %575 = vmatpush1.bf16.msra.mxu0 %v522
        %576 = vmatprep.subr.bf16.mxu0 %v527
        %577 = vmatpush1.bf16.msra.mxu0 %v526
        %578 = vmatprep.subr.bf16.mxu0 0
        %579 = vmatpush1.bf16.msra.mxu0 0
        %580 = vmatprep.subr.bf16.mxu0 0
        %581 = vmatpush1.bf16.msra.mxu0 0
        %582 = vmatprep.subr.bf16.mxu0 0
        %583 = vmatpush1.bf16.msra.mxu0 0
        %584 = vmatprep.subr.bf16.mxu0 0
        %585 = vmatpush1.bf16.msra.mxu0 0
        %586 = vmatprep.subr.bf16.mxu0 0
        %587 = vmatpush1.bf16.msra.mxu0 0
        %588 = vmatprep.subr.bf16.mxu0 0
        %589 = vmatpush1.bf16.msra.mxu0 0
        %590 = vmatprep.subr.bf16.mxu0 0
        %591 = vmatpush1.bf16.msra.mxu0 0
        %592 = vmatprep.subr.bf16.mxu0 0
        %593 = vmatpush1.bf16.msra.mxu0 0
        %594 = vmatprep.mubr.bf16.mxu0 0
        %595 = vmatmul.mubr.bf16.gmra.mrb[0].mxu0 %v344
        %v596 = vpop.f32.mrb[0].mxu0
        %v597 = vadd.f32 %v385, %v596
        %v598 = vpop.f32.mrb[0].mxu0
        %v599 = vadd.f32 %v389, %v598
        %v600 = vpop.f32.mrb[0].mxu0
        %v601 = vadd.f32 %v385, %v600
        %v602 = vpop.f32.mrb[0].mxu0
        %v603 = vadd.f32 %v389, %v602
        %604 = vmatprep.mubr.bf16.mxu0 0
        %605 = vmatmul.mubr.bf16.gmra.mrb[0].mxu0 %v345
        %v606 = vpop.f32.mrb[0].mxu0
        %v607 = vadd.f32 %v385, %v606
        %v608 = vpop.f32.mrb[0].mxu0
        %v609 = vadd.f32 %v389, %v608
        %v610 = vpop.f32.mrb[0].mxu0
        %v611 = vadd.f32 %v385, %v610
        %v612 = vpop.f32.mrb[0].mxu0
        %v613 = vadd.f32 %v389, %v612
        %614 = vmatprep.mubr.bf16.mxu0 0
        %615 = vmatmul.mubr.bf16.gmra.mrb[0].mxu0 %v346
        %v616 = vpop.f32.mrb[0].mxu0
        %v617 = vadd.f32 %v385, %v616
        %v618 = vpop.f32.mrb[0].mxu0
        %v619 = vadd.f32 %v389, %v618
        %v620 = vpop.f32.mrb[0].mxu0
        %v621 = vadd.f32 %v385, %v620
        %v622 = vpop.f32.mrb[0].mxu0
        %v623 = vadd.f32 %v389, %v622
        %624 = vmatprep.mubr.bf16.mxu0 0
        %625 = vmatmul.mubr.bf16.gmra.mrb[0].mxu0 %v347
        %v626 = vpop.f32.mrb[0].mxu0
        %v627 = vadd.f32 %v385, %v626
        %v628 = vpop.f32.mrb[0].mxu0
        %v629 = vadd.f32 %v389, %v628
        %v630 = vpop.f32.mrb[0].mxu0
        %v631 = vadd.f32 %v385, %v630
        %v632 = vpop.f32.mrb[0].mxu0
        %v633 = vadd.f32 %v389, %v632
        %634 = vdwg.mxu0
        %635 = vmatprep.subr.bf16.mxu0 %v501
        %636 = vmatpush1.bf16.msra.mxu0 %v500
        %637 = vmatprep.subr.bf16.mxu0 %v505
        %638 = vmatpush1.bf16.msra.mxu0 %v504
        %639 = vmatprep.subr.bf16.mxu0 %v509
        %640 = vmatpush1.bf16.msra.mxu0 %v508
        %641 = vmatprep.subr.bf16.mxu0 %v513
        %642 = vmatpush1.bf16.msra.mxu0 %v512
        %643 = vmatprep.subr.bf16.mxu0 %v517
        %644 = vmatpush1.bf16.msra.mxu0 %v516
        %645 = vmatprep.subr.bf16.mxu0 %v521
        %646 = vmatpush1.bf16.msra.mxu0 %v520
        %647 = vmatprep.subr.bf16.mxu0 %v525
        %648 = vmatpush1.bf16.msra.mxu0 %v524
        %649 = vmatprep.subr.bf16.mxu0 %v529
        %650 = vmatpush1.bf16.msra.mxu0 %v528
        %651 = vmatprep.subr.bf16.mxu0 0
        %652 = vmatpush1.bf16.msra.mxu0 0
        %653 = vmatprep.subr.bf16.mxu0 0
        %654 = vmatpush1.bf16.msra.mxu0 0
        %655 = vmatprep.subr.bf16.mxu0 0
        %656 = vmatpush1.bf16.msra.mxu0 0
        %657 = vmatprep.subr.bf16.mxu0 0
        %658 = vmatpush1.bf16.msra.mxu0 0
        %659 = vmatprep.subr.bf16.mxu0 0
        %660 = vmatpush1.bf16.msra.mxu0 0
        %661 = vmatprep.subr.bf16.mxu0 0
        %662 = vmatpush1.bf16.msra.mxu0 0
        %663 = vmatprep.subr.bf16.mxu0 0
        %664 = vmatpush1.bf16.msra.mxu0 0
        %665 = vmatprep.subr.bf16.mxu0 0
        %666 = vmatpush1.bf16.msra.mxu0 0
        %667 = vmatprep.mubr.bf16.mxu0 0
        %668 = vmatmul.mubr.bf16.gmra.mrb[0].mxu0 %v344
        %v669 = vpop.f32.mrb[0].mxu0
        %v670 = vadd.f32 %v393, %v669
        %v671 = vpop.f32.mrb[0].mxu0
        %v672 = vadd.f32 %v397, %v671
        %v673 = vpop.f32.mrb[0].mxu0
        %v674 = vadd.f32 %v393, %v673
        %v675 = vpop.f32.mrb[0].mxu0
        %v676 = vadd.f32 %v397, %v675
        %677 = vmatprep.mubr.bf16.mxu0 0
        %678 = vmatmul.mubr.bf16.gmra.mrb[0].mxu0 %v345
        %v679 = vpop.f32.mrb[0].mxu0
        %v680 = vadd.f32 %v393, %v679
        %v681 = vpop.f32.mrb[0].mxu0
        %v682 = vadd.f32 %v397, %v681
        %v683 = vpop.f32.mrb[0].mxu0
        %v684 = vadd.f32 %v393, %v683
        %v685 = vpop.f32.mrb[0].mxu0
        %v686 = vadd.f32 %v397, %v685
        %687 = vmatprep.mubr.bf16.mxu0 0
        %688 = vmatmul.mubr.bf16.gmra.mrb[0].mxu0 %v346
        %v689 = vpop.f32.mrb[0].mxu0
        %v690 = vadd.f32 %v393, %v689
        %v691 = vpop.f32.mrb[0].mxu0
        %v692 = vadd.f32 %v397, %v691
        %v693 = vpop.f32.mrb[0].mxu0
        %v694 = vadd.f32 %v393, %v693
        %v695 = vpop.f32.mrb[0].mxu0
        %v696 = vadd.f32 %v397, %v695
        %697 = vmatprep.mubr.bf16.mxu0 0
        %698 = vmatmul.mubr.bf16.gmra.mrb[0].mxu0 %v347
        %v699 = vpop.f32.mrb[0].mxu0
        %v700 = vadd.f32 %v393, %v699
        %v701 = vpop.f32.mrb[0].mxu0
        %v702 = vadd.f32 %v397, %v701
        %v703 = vpop.f32.mrb[0].mxu0
        %v704 = vadd.f32 %v393, %v703
        %v705 = vpop.f32.mrb[0].mxu0
        %v706 = vadd.f32 %v397, %v705
        %707 = vdwg.mxu0
        %v708 = vmul.f32 %v597, 0.5
        %v709 = vmul.f32 %v599, 0.5
        %v710 = vmul.f32 %v670, 0.5
        %v711 = vmul.f32 %v672, 0.5
        %v712 = vmul.f32 %v601, 0.5
        %v713 = vmul.f32 %v603, 0.5
        %v714 = vmul.f32 %v674, 0.5
        %v715 = vmul.f32 %v676, 0.5
        %v716 = vmul.f32 %v607, 0.5
        %v717 = vmul.f32 %v609, 0.5
        %v718 = vmul.f32 %v680, 0.5
        %v719 = vmul.f32 %v682, 0.5
        %v720 = vmul.f32 %v611, 0.5
        %v721 = vmul.f32 %v613, 0.5
        %v722 = vmul.f32 %v684, 0.5
        %v723 = vmul.f32 %v686, 0.5
        %v724 = vmul.f32 %v617, 0.5
        %v725 = vmul.f32 %v619, 0.5
        %v726 = vmul.f32 %v690, 0.5
        %v727 = vmul.f32 %v692, 0.5
        %v728 = vmul.f32 %v621, 0.5
        %v729 = vmul.f32 %v623, 0.5
        %v730 = vmul.f32 %v694, 0.5
        %v731 = vmul.f32 %v696, 0.5
        %v732 = vmul.f32 %v627, 0.5
        %v733 = vmul.f32 %v629, 0.5
        %v734 = vmul.f32 %v700, 0.5
        %v735 = vmul.f32 %v702, 0.5
        %v736 = vmul.f32 %v631, 0.5
        %v737 = vmul.f32 %v633, 0.5
        %v738 = vmul.f32 %v704, 0.5
        %v739 = vmul.f32 %v706, 0.5
        %v740 = vmul.f32 %v597, 0.044715
        %v741 = vmul.f32 %v599, 0.044715
        %v742 = vmul.f32 %v670, 0.044715
        %v743 = vmul.f32 %v672, 0.044715
        %v744 = vmul.f32 %v601, 0.044715
        %v745 = vmul.f32 %v603, 0.044715
        %v746 = vmul.f32 %v674, 0.044715
        %v747 = vmul.f32 %v676, 0.044715
        %v748 = vmul.f32 %v607, 0.044715
        %v749 = vmul.f32 %v609, 0.044715
        %v750 = vmul.f32 %v680, 0.044715
        %v751 = vmul.f32 %v682, 0.044715
        %v752 = vmul.f32 %v611, 0.044715
        %v753 = vmul.f32 %v613, 0.044715
        %v754 = vmul.f32 %v684, 0.044715
        %v755 = vmul.f32 %v686, 0.044715
        %v756 = vmul.f32 %v617, 0.044715
        %v757 = vmul.f32 %v619, 0.044715
        %v758 = vmul.f32 %v690, 0.044715
        %v759 = vmul.f32 %v692, 0.044715
        %v760 = vmul.f32 %v621, 0.044715
        %v761 = vmul.f32 %v623, 0.044715
        %v762 = vmul.f32 %v694, 0.044715
        %v763 = vmul.f32 %v696, 0.044715
        %v764 = vmul.f32 %v627, 0.044715
        %v765 = vmul.f32 %v629, 0.044715
        %v766 = vmul.f32 %v700, 0.044715
        %v767 = vmul.f32 %v702, 0.044715
        %v768 = vmul.f32 %v631, 0.044715
        %v769 = vmul.f32 %v633, 0.044715
        %v770 = vmul.f32 %v704, 0.044715
        %v771 = vmul.f32 %v706, 0.044715
        %v772 = vmul.f32 %v740, %v597
        %v773 = vmul.f32 %v741, %v599
        %v774 = vmul.f32 %v742, %v670
        %v775 = vmul.f32 %v743, %v672
        %v776 = vmul.f32 %v744, %v601
        %v777 = vmul.f32 %v745, %v603
        %v778 = vmul.f32 %v746, %v674
        %v779 = vmul.f32 %v747, %v676
        %v780 = vmul.f32 %v748, %v607
        %v781 = vmul.f32 %v749, %v609
        %v782 = vmul.f32 %v750, %v680
        %v783 = vmul.f32 %v751, %v682
        %v784 = vmul.f32 %v752, %v611
        %v785 = vmul.f32 %v753, %v613
        %v786 = vmul.f32 %v754, %v684
        %v787 = vmul.f32 %v755, %v686
        %v788 = vmul.f32 %v756, %v617
        %v789 = vmul.f32 %v757, %v619
        %v790 = vmul.f32 %v758, %v690
        %v791 = vmul.f32 %v759, %v692
        %v792 = vmul.f32 %v760, %v621
        %v793 = vmul.f32 %v761, %v623
        %v794 = vmul.f32 %v762, %v694
        %v795 = vmul.f32 %v763, %v696
        %v796 = vmul.f32 %v764, %v627
        %v797 = vmul.f32 %v765, %v629
        %v798 = vmul.f32 %v766, %v700
        %v799 = vmul.f32 %v767, %v702
        %v800 = vmul.f32 %v768, %v631
        %v801 = vmul.f32 %v769, %v633
        %v802 = vmul.f32 %v770, %v704
        %v803 = vmul.f32 %v771, %v706
        %v804 = vmul.f32 %v772, %v597
        %v805 = vmul.f32 %v773, %v599
        %v806 = vmul.f32 %v774, %v670
        %v807 = vmul.f32 %v775, %v672
        %v808 = vmul.f32 %v776, %v601
        %v809 = vmul.f32 %v777, %v603
        %v810 = vmul.f32 %v778, %v674
        %v811 = vmul.f32 %v779, %v676
        %v812 = vmul.f32 %v780, %v607
        %v813 = vmul.f32 %v781, %v609
        %v814 = vmul.f32 %v782, %v680
        %v815 = vmul.f32 %v783, %v682
        %v816 = vmul.f32 %v784, %v611
        %v817 = vmul.f32 %v785, %v613
        %v818 = vmul.f32 %v786, %v684
        %v819 = vmul.f32 %v787, %v686
        %v820 = vmul.f32 %v788, %v617
        %v821 = vmul.f32 %v789, %v619
        %v822 = vmul.f32 %v790, %v690
        %v823 = vmul.f32 %v791, %v692
        %v824 = vmul.f32 %v792, %v621
        %v825 = vmul.f32 %v793, %v623
        %v826 = vmul.f32 %v794, %v694
        %v827 = vmul.f32 %v795, %v696
        %v828 = vmul.f32 %v796, %v627
        %v829 = vmul.f32 %v797, %v629
        %v830 = vmul.f32 %v798, %v700
        %v831 = vmul.f32 %v799, %v702
        %v832 = vmul.f32 %v800, %v631
        %v833 = vmul.f32 %v801, %v633
        %v834 = vmul.f32 %v802, %v704
        %v835 = vmul.f32 %v803, %v706
        %v836 = vadd.f32 %v597, %v804
        %v837 = vadd.f32 %v599, %v805
        %v838 = vadd.f32 %v670, %v806
        %v839 = vadd.f32 %v672, %v807
        %v840 = vadd.f32 %v601, %v808
        %v841 = vadd.f32 %v603, %v809
        %v842 = vadd.f32 %v674, %v810
        %v843 = vadd.f32 %v676, %v811
        %v844 = vadd.f32 %v607, %v812
        %v845 = vadd.f32 %v609, %v813
        %v846 = vadd.f32 %v680, %v814
        %v847 = vadd.f32 %v682, %v815
        %v848 = vadd.f32 %v611, %v816
        %v849 = vadd.f32 %v613, %v817
        %v850 = vadd.f32 %v684, %v818
        %v851 = vadd.f32 %v686, %v819
        %v852 = vadd.f32 %v617, %v820
        %v853 = vadd.f32 %v619, %v821
        %v854 = vadd.f32 %v690, %v822
        %v855 = vadd.f32 %v692, %v823
        %v856 = vadd.f32 %v621, %v824
        %v857 = vadd.f32 %v623, %v825
        %v858 = vadd.f32 %v694, %v826
        %v859 = vadd.f32 %v696, %v827
        %v860 = vadd.f32 %v627, %v828
        %v861 = vadd.f32 %v629, %v829
        %v862 = vadd.f32 %v700, %v830
        %v863 = vadd.f32 %v702, %v831
        %v864 = vadd.f32 %v631, %v832
        %v865 = vadd.f32 %v633, %v833
        %v866 = vadd.f32 %v704, %v834
        %v867 = vadd.f32 %v706, %v835
        %v868 = vmul.f32 %v836, 0.7978846
        %v869 = vmul.f32 %v837, 0.7978846
        %v870 = vmul.f32 %v838, 0.7978846
        %v871 = vmul.f32 %v839, 0.7978846
        %v872 = vmul.f32 %v840, 0.7978846
        %v873 = vmul.f32 %v841, 0.7978846
        %v874 = vmul.f32 %v842, 0.7978846
        %v875 = vmul.f32 %v843, 0.7978846
        %v876 = vmul.f32 %v844, 0.7978846
        %v877 = vmul.f32 %v845, 0.7978846
        %v878 = vmul.f32 %v846, 0.7978846
        %v879 = vmul.f32 %v847, 0.7978846
        %v880 = vmul.f32 %v848, 0.7978846
        %v881 = vmul.f32 %v849, 0.7978846
        %v882 = vmul.f32 %v850, 0.7978846
        %v883 = vmul.f32 %v851, 0.7978846
        %v884 = vmul.f32 %v852, 0.7978846
        %v885 = vmul.f32 %v853, 0.7978846
        %v886 = vmul.f32 %v854, 0.7978846
        %v887 = vmul.f32 %v855, 0.7978846
        %v888 = vmul.f32 %v856, 0.7978846
        %v889 = vmul.f32 %v857, 0.7978846
        %v890 = vmul.f32 %v858, 0.7978846
        %v891 = vmul.f32 %v859, 0.7978846
        %v892 = vmul.f32 %v860, 0.7978846
        %v893 = vmul.f32 %v861, 0.7978846
        %v894 = vmul.f32 %v862, 0.7978846
        %v895 = vmul.f32 %v863, 0.7978846
        %v896 = vmul.f32 %v864, 0.7978846
        %v897 = vmul.f32 %v865, 0.7978846
        %v898 = vmul.f32 %v866, 0.7978846
        %v899 = vmul.f32 %v867, 0.7978846
        %v900 = vtanh.pop %v868
        %v901 = vtanh.pop %v869
        %v902 = vtanh.pop %v870
        %v903 = vtanh.pop %v871
        %v904 = vtanh.pop %v872
        %v905 = vtanh.pop %v873
        %v906 = vtanh.pop %v874
        %v907 = vtanh.pop %v875
        %v908 = vtanh.pop %v876
        %v909 = vtanh.pop %v877
        %v910 = vtanh.pop %v878
        %v911 = vtanh.pop %v879
        %v912 = vtanh.pop %v880
        %v913 = vtanh.pop %v881
        %v914 = vtanh.pop %v882
        %v915 = vtanh.pop %v883
        %v916 = vtanh.pop %v884
        %v917 = vtanh.pop %v885
        %v918 = vtanh.pop %v886
        %v919 = vtanh.pop %v887
        %v920 = vtanh.pop %v888
        %v921 = vtanh.pop %v889
        %v922 = vtanh.pop %v890
        %v923 = vtanh.pop %v891
        %v924 = vtanh.pop %v892
        %v925 = vtanh.pop %v893
        %v926 = vtanh.pop %v894
        %v927 = vtanh.pop %v895
        %v928 = vtanh.pop %v896
        %v929 = vtanh.pop %v897
        %v930 = vtanh.pop %v898
        %v931 = vtanh.pop %v899
        %v932 = vadd.f32 %v900, 1.0
        %v933 = vadd.f32 %v901, 1.0
        %v934 = vadd.f32 %v902, 1.0
        %v935 = vadd.f32 %v903, 1.0
        %v936 = vadd.f32 %v904, 1.0
        %v937 = vadd.f32 %v905, 1.0
        %v938 = vadd.f32 %v906, 1.0
        %v939 = vadd.f32 %v907, 1.0
        %v940 = vadd.f32 %v908, 1.0
        %v941 = vadd.f32 %v909, 1.0
        %v942 = vadd.f32 %v910, 1.0
        %v943 = vadd.f32 %v911, 1.0
        %v944 = vadd.f32 %v912, 1.0
        %v945 = vadd.f32 %v913, 1.0
        %v946 = vadd.f32 %v914, 1.0
        %v947 = vadd.f32 %v915, 1.0
        %v948 = vadd.f32 %v916, 1.0
        %v949 = vadd.f32 %v917, 1.0
        %v950 = vadd.f32 %v918, 1.0
        %v951 = vadd.f32 %v919, 1.0
        %v952 = vadd.f32 %v920, 1.0
        %v953 = vadd.f32 %v921, 1.0
        %v954 = vadd.f32 %v922, 1.0
        %v955 = vadd.f32 %v923, 1.0
        %v956 = vadd.f32 %v924, 1.0
        %v957 = vadd.f32 %v925, 1.0
        %v958 = vadd.f32 %v926, 1.0
        %v959 = vadd.f32 %v927, 1.0
        %v960 = vadd.f32 %v928, 1.0
        %v961 = vadd.f32 %v929, 1.0
        %v962 = vadd.f32 %v930, 1.0
        %v963 = vadd.f32 %v931, 1.0
        %v964 = vmul.f32 %v708, %v932
        %v965 = vmul.f32 %v709, %v933
        %v966 = vmul.f32 %v710, %v934
        %v967 = vmul.f32 %v711, %v935
        %v968 = vmul.f32 %v712, %v936
        %v969 = vmul.f32 %v713, %v937
        %v970 = vmul.f32 %v714, %v938
        %v971 = vmul.f32 %v715, %v939
        %v972 = vmul.f32 %v716, %v940
        %v973 = vmul.f32 %v717, %v941
        %v974 = vmul.f32 %v718, %v942
        %v975 = vmul.f32 %v719, %v943
        %v976 = vmul.f32 %v720, %v944
        %v977 = vmul.f32 %v721, %v945
        %v978 = vmul.f32 %v722, %v946
        %v979 = vmul.f32 %v723, %v947
        %v980 = vmul.f32 %v724, %v948
        %v981 = vmul.f32 %v725, %v949
        %v982 = vmul.f32 %v726, %v950
        %v983 = vmul.f32 %v727, %v951
        %v984 = vmul.f32 %v728, %v952
        %v985 = vmul.f32 %v729, %v953
        %v986 = vmul.f32 %v730, %v954
        %v987 = vmul.f32 %v731, %v955
        %v988 = vmul.f32 %v732, %v956
        %v989 = vmul.f32 %v733, %v957
        %v990 = vmul.f32 %v734, %v958
        %v991 = vmul.f32 %v735, %v959
        %v992 = vmul.f32 %v736, %v960
        %v993 = vmul.f32 %v737, %v961
        %v994 = vmul.f32 %v738, %v962
        %v995 = vmul.f32 %v739, %v963
        %v996 = vld [vmem:[#allocation2] sm:$0xff]
        %v997 = vld [vmem:[#allocation2 + $0x8] sm:$0xff]
        %v998 = vld [vmem:[#allocation2 + $0x10] sm:$0xff]
        %v999 = vld [vmem:[#allocation2 + $0x18] sm:$0xff]
        %v1000 = vld [vmem:[#allocation2 + $0x20] sm:$0xff]
        %v1001 = vld [vmem:[#allocation2 + $0x28] sm:$0xff]
        %v1002 = vld [vmem:[#allocation2 + $0x30] sm:$0xff]
        %v1003 = vld [vmem:[#allocation2 + $0x38] sm:$0xff]
        %v1004 = vpack.c.bf16 %v968, %v964
        %v1005 = vpack.c.bf16 %v969, %v965
        %v1006 = vpack.c.bf16 %v970, %v966
        %v1007 = vpack.c.bf16 %v971, %v967
        %v1008 = vpack.c.bf16 %v976, %v972
        %v1009 = vpack.c.bf16 %v977, %v973
        %v1010 = vpack.c.bf16 %v978, %v974
        %v1011 = vpack.c.bf16 %v979, %v975
        %v1012 = vpack.c.bf16 %v984, %v980
        %v1013 = vpack.c.bf16 %v985, %v981
        %v1014 = vpack.c.bf16 %v986, %v982
        %v1015 = vpack.c.bf16 %v987, %v983
        %v1016 = vpack.c.bf16 %v992, %v988
        %v1017 = vpack.c.bf16 %v993, %v989
        %v1018 = vpack.c.bf16 %v994, %v990
        %v1019 = vpack.c.bf16 %v995, %v991
        %v1020 = vld [vmem:[#allocation8] sm:$0xf]
        %v1021 = vld [vmem:[#allocation8 + $0x4] sm:$0xf]
        %v1022 = vld [vmem:[#allocation8 + $0x8] sm:$0xf]
        %v1023 = vld [vmem:[#allocation8 + $0xc] sm:$0xf]
        %v1024 = vld [vmem:[#allocation8 + $0x10] sm:$0xf]
        %v1025 = vld [vmem:[#allocation8 + $0x14] sm:$0xf]
        %v1026 = vld [vmem:[#allocation8 + $0x18] sm:$0xf]
        %v1027 = vld [vmem:[#allocation8 + $0x1c] sm:$0xf]
        %v1028 = vld [vmem:[#allocation8 + $0x20] sm:$0xf]
        %v1029 = vld [vmem:[#allocation8 + $0x24] sm:$0xf]
        %v1030 = vld [vmem:[#allocation8 + $0x28] sm:$0xf]
        %v1031 = vld [vmem:[#allocation8 + $0x2c] sm:$0xf]
        %v1032 = vld [vmem:[#allocation8 + $0x30] sm:$0xf]
        %v1033 = vld [vmem:[#allocation8 + $0x34] sm:$0xf]
        %v1034 = vld [vmem:[#allocation8 + $0x38] sm:$0xf]
        %v1035 = vld [vmem:[#allocation8 + $0x3c] sm:$0xf]
        %v1036 = vld [vmem:[#allocation8 + $0x40] sm:$0xf]
        %v1037 = vld [vmem:[#allocation8 + $0x44] sm:$0xf]
        %v1038 = vld [vmem:[#allocation8 + $0x48] sm:$0xf]
        %v1039 = vld [vmem:[#allocation8 + $0x4c] sm:$0xf]
        %v1040 = vld [vmem:[#allocation8 + $0x50] sm:$0xf]
        %v1041 = vld [vmem:[#allocation8 + $0x54] sm:$0xf]
        %v1042 = vld [vmem:[#allocation8 + $0x58] sm:$0xf]
        %v1043 = vld [vmem:[#allocation8 + $0x5c] sm:$0xf]
        %v1044 = vld [vmem:[#allocation8 + $0x60] sm:$0xf]
        %v1045 = vld [vmem:[#allocation8 + $0x64] sm:$0xf]
        %v1046 = vld [vmem:[#allocation8 + $0x68] sm:$0xf]
        %v1047 = vld [vmem:[#allocation8 + $0x6c] sm:$0xf]
        %v1048 = vld [vmem:[#allocation8 + $0x70] sm:$0xf]
        %v1049 = vld [vmem:[#allocation8 + $0x74] sm:$0xf]
        %v1050 = vld [vmem:[#allocation8 + $0x78] sm:$0xf]
        %v1051 = vld [vmem:[#allocation8 + $0x7c] sm:$0xf]
        %v1052 = vld [vmem:[#allocation8 + $0x80] sm:$0xf]
        %v1053 = vld [vmem:[#allocation8 + $0x84] sm:$0xf]
        %v1054 = vld [vmem:[#allocation8 + $0x88] sm:$0xf]
        %v1055 = vld [vmem:[#allocation8 + $0x8c] sm:$0xf]
        %v1056 = vld [vmem:[#allocation8 + $0x90] sm:$0xf]
        %v1057 = vld [vmem:[#allocation8 + $0x94] sm:$0xf]
        %v1058 = vld [vmem:[#allocation8 + $0x98] sm:$0xf]
        %v1059 = vld [vmem:[#allocation8 + $0x9c] sm:$0xf]
        %v1060 = vld [vmem:[#allocation8 + $0xa0] sm:$0xf]
        %v1061 = vld [vmem:[#allocation8 + $0xa4] sm:$0xf]
        %v1062 = vld [vmem:[#allocation8 + $0xa8] sm:$0xf]
        %v1063 = vld [vmem:[#allocation8 + $0xac] sm:$0xf]
        %v1064 = vld [vmem:[#allocation8 + $0xb0] sm:$0xf]
        %v1065 = vld [vmem:[#allocation8 + $0xb4] sm:$0xf]
        %v1066 = vld [vmem:[#allocation8 + $0xb8] sm:$0xf]
        %v1067 = vld [vmem:[#allocation8 + $0xbc] sm:$0xf]
        %v1068 = vld [vmem:[#allocation8 + $0xc0] sm:$0xf]
        %v1069 = vld [vmem:[#allocation8 + $0xc4] sm:$0xf]
        %v1070 = vld [vmem:[#allocation8 + $0xc8] sm:$0xf]
        %v1071 = vld [vmem:[#allocation8 + $0xcc] sm:$0xf]
        %v1072 = vld [vmem:[#allocation8 + $0xd0] sm:$0xf]
        %v1073 = vld [vmem:[#allocation8 + $0xd4] sm:$0xf]
        %v1074 = vld [vmem:[#allocation8 + $0xd8] sm:$0xf]
        %v1075 = vld [vmem:[#allocation8 + $0xdc] sm:$0xf]
        %v1076 = vld [vmem:[#allocation8 + $0xe0] sm:$0xf]
        %v1077 = vld [vmem:[#allocation8 + $0xe4] sm:$0xf]
        %v1078 = vld [vmem:[#allocation8 + $0xe8] sm:$0xf]
        %v1079 = vld [vmem:[#allocation8 + $0xec] sm:$0xf]
        %v1080 = vld [vmem:[#allocation8 + $0xf0] sm:$0xf]
        %v1081 = vld [vmem:[#allocation8 + $0xf4] sm:$0xf]
        %v1082 = vld [vmem:[#allocation8 + $0xf8] sm:$0xf]
        %v1083 = vld [vmem:[#allocation8 + $0xfc] sm:$0xf]
        %v1148 = vunpack.c.l.b16 %v1020
        %v1149 = vunpack.c.l.b16 %v1021
        %v1150 = vunpack.c.l.b16 %v1022
        %v1151 = vunpack.c.l.b16 %v1023
        %v1152 = vunpack.c.l.b16 %v1024
        %v1153 = vunpack.c.l.b16 %v1025
        %v1154 = vunpack.c.l.b16 %v1026
        %v1155 = vunpack.c.l.b16 %v1027
        %v1156 = vunpack.c.l.b16 %v1028
        %v1157 = vunpack.c.l.b16 %v1029
        %v1158 = vunpack.c.l.b16 %v1030
        %v1159 = vunpack.c.l.b16 %v1031
        %v1160 = vunpack.c.l.b16 %v1032
        %v1161 = vunpack.c.l.b16 %v1033
        %v1162 = vunpack.c.l.b16 %v1034
        %v1163 = vunpack.c.l.b16 %v1035
        %v1164 = vunpack.c.l.b16 %v1036
        %v1165 = vunpack.c.l.b16 %v1037
        %v1166 = vunpack.c.l.b16 %v1038
        %v1167 = vunpack.c.l.b16 %v1039
        %v1168 = vunpack.c.l.b16 %v1040
        %v1169 = vunpack.c.l.b16 %v1041
        %v1170 = vunpack.c.l.b16 %v1042
        %v1171 = vunpack.c.l.b16 %v1043
        %v1172 = vunpack.c.l.b16 %v1044
        %v1173 = vunpack.c.l.b16 %v1045
        %v1174 = vunpack.c.l.b16 %v1046
        %v1175 = vunpack.c.l.b16 %v1047
        %v1176 = vunpack.c.l.b16 %v1048
        %v1177 = vunpack.c.l.b16 %v1049
        %v1178 = vunpack.c.l.b16 %v1050
        %v1179 = vunpack.c.l.b16 %v1051
        %v1180 = vunpack.c.l.b16 %v1052
        %v1181 = vunpack.c.l.b16 %v1053
        %v1182 = vunpack.c.l.b16 %v1054
        %v1183 = vunpack.c.l.b16 %v1055
        %v1184 = vunpack.c.l.b16 %v1056
        %v1185 = vunpack.c.l.b16 %v1057
        %v1186 = vunpack.c.l.b16 %v1058
        %v1187 = vunpack.c.l.b16 %v1059
        %v1188 = vunpack.c.l.b16 %v1060
        %v1189 = vunpack.c.l.b16 %v1061
        %v1190 = vunpack.c.l.b16 %v1062
        %v1191 = vunpack.c.l.b16 %v1063
        %v1192 = vunpack.c.l.b16 %v1064
        %v1193 = vunpack.c.l.b16 %v1065
        %v1194 = vunpack.c.l.b16 %v1066
        %v1195 = vunpack.c.l.b16 %v1067
        %v1196 = vunpack.c.l.b16 %v1068
        %v1197 = vunpack.c.l.b16 %v1069
        %v1198 = vunpack.c.l.b16 %v1070
        %v1199 = vunpack.c.l.b16 %v1071
        %v1200 = vunpack.c.l.b16 %v1072
        %v1201 = vunpack.c.l.b16 %v1073
        %v1202 = vunpack.c.l.b16 %v1074
        %v1203 = vunpack.c.l.b16 %v1075
        %v1204 = vunpack.c.l.b16 %v1076
        %v1205 = vunpack.c.l.b16 %v1077
        %v1206 = vunpack.c.l.b16 %v1078
        %v1207 = vunpack.c.l.b16 %v1079
        %v1208 = vunpack.c.l.b16 %v1080
        %v1209 = vunpack.c.l.b16 %v1081
        %v1210 = vunpack.c.l.b16 %v1082
        %v1211 = vunpack.c.l.b16 %v1083
        %v1212 = vpack.c.b16 %v1149, %v1148
        %v1213 = vpack.c.b16 %v1151, %v1150
        %v1214 = vpack.c.b16 %v1153, %v1152
        %v1215 = vpack.c.b16 %v1155, %v1154
        %v1216 = vpack.c.b16 %v1157, %v1156
        %v1217 = vpack.c.b16 %v1159, %v1158
        %v1218 = vpack.c.b16 %v1161, %v1160
        %v1219 = vpack.c.b16 %v1163, %v1162
        %v1220 = vpack.c.b16 %v1165, %v1164
        %v1221 = vpack.c.b16 %v1167, %v1166
        %v1222 = vpack.c.b16 %v1169, %v1168
        %v1223 = vpack.c.b16 %v1171, %v1170
        %v1224 = vpack.c.b16 %v1173, %v1172
        %v1225 = vpack.c.b16 %v1175, %v1174
        %v1226 = vpack.c.b16 %v1177, %v1176
        %v1227 = vpack.c.b16 %v1179, %v1178
        %v1228 = vpack.c.b16 %v1181, %v1180
        %v1229 = vpack.c.b16 %v1183, %v1182
        %v1230 = vpack.c.b16 %v1185, %v1184
        %v1231 = vpack.c.b16 %v1187, %v1186
        %v1232 = vpack.c.b16 %v1189, %v1188
        %v1233 = vpack.c.b16 %v1191, %v1190
        %v1234 = vpack.c.b16 %v1193, %v1192
        %v1235 = vpack.c.b16 %v1195, %v1194
        %v1236 = vpack.c.b16 %v1197, %v1196
        %v1237 = vpack.c.b16 %v1199, %v1198
        %v1238 = vpack.c.b16 %v1201, %v1200
        %v1239 = vpack.c.b16 %v1203, %v1202
        %v1240 = vpack.c.b16 %v1205, %v1204
        %v1241 = vpack.c.b16 %v1207, %v1206
        %v1242 = vpack.c.b16 %v1209, %v1208
        %v1243 = vpack.c.b16 %v1211, %v1210
        %1276 = vmatprep.subr.bf16.mxu0 0
        %1277 = vmatpush1.bf16.msra.mxu0 %v1212
        %1278 = vmatprep.subr.bf16.mxu0 0
        %1279 = vmatpush1.bf16.msra.mxu0 %v1213
        %1280 = vmatprep.subr.bf16.mxu0 0
        %1281 = vmatpush1.bf16.msra.mxu0 %v1214
        %1282 = vmatprep.subr.bf16.mxu0 0
        %1283 = vmatpush1.bf16.msra.mxu0 %v1215
        %1284 = vmatprep.subr.bf16.mxu0 0
        %1285 = vmatpush1.bf16.msra.mxu0 %v1216
        %1286 = vmatprep.subr.bf16.mxu0 0
        %1287 = vmatpush1.bf16.msra.mxu0 %v1217
        %1288 = vmatprep.subr.bf16.mxu0 0
        %1289 = vmatpush1.bf16.msra.mxu0 %v1218
        %1290 = vmatprep.subr.bf16.mxu0 0
        %1291 = vmatpush1.bf16.msra.mxu0 %v1219
        %1292 = vmatprep.subr.bf16.mxu0 0
        %1293 = vmatpush1.bf16.msra.mxu0 %v1220
        %1294 = vmatprep.subr.bf16.mxu0 0
        %1295 = vmatpush1.bf16.msra.mxu0 %v1221
        %1296 = vmatprep.subr.bf16.mxu0 0
        %1297 = vmatpush1.bf16.msra.mxu0 %v1222
        %1298 = vmatprep.subr.bf16.mxu0 0
        %1299 = vmatpush1.bf16.msra.mxu0 %v1223
        %1300 = vmatprep.subr.bf16.mxu0 0
        %1301 = vmatpush1.bf16.msra.mxu0 %v1224
        %1302 = vmatprep.subr.bf16.mxu0 0
        %1303 = vmatpush1.bf16.msra.mxu0 %v1225
        %1304 = vmatprep.subr.bf16.mxu0 0
        %1305 = vmatpush1.bf16.msra.mxu0 %v1226
        %1306 = vmatprep.subr.bf16.mxu0 0
        %1307 = vmatpush1.bf16.msra.mxu0 %v1227
        %1308 = vmatprep.mubr.bf16.mxu0 %v1005
        %1309 = vmatmul.mubr.bf16.gmra.mrb[0].mxu0 %v1004
        %v1310 = vpop.f32.mrb[0].mxu0
        %v1311 = vadd.f32 0.0, %v1310
        %v1312 = vpop.f32.mrb[0].mxu0
        %v1313 = vpop.f32.mrb[0].mxu0
        %v1314 = vadd.f32 0.0, %v1313
        %v1315 = vpop.f32.mrb[0].mxu0
        %1316 = vmatprep.mubr.bf16.mxu0 %v1009
        %1317 = vmatmul.mubr.bf16.gmra.mrb[0].mxu0 %v1008
        %v1318 = vpop.f32.mrb[0].mxu0
        %v1319 = vadd.f32 0.0, %v1318
        %v1320 = vpop.f32.mrb[0].mxu0
        %v1321 = vpop.f32.mrb[0].mxu0
        %v1322 = vadd.f32 0.0, %v1321
        %v1323 = vpop.f32.mrb[0].mxu0
        %1324 = vmatprep.mubr.bf16.mxu0 %v1013
        %1325 = vmatmul.mubr.bf16.gmra.mrb[0].mxu0 %v1012
        %v1326 = vpop.f32.mrb[0].mxu0
        %v1327 = vadd.f32 0.0, %v1326
        %v1328 = vpop.f32.mrb[0].mxu0
        %v1329 = vpop.f32.mrb[0].mxu0
        %v1330 = vadd.f32 0.0, %v1329
        %v1331 = vpop.f32.mrb[0].mxu0
        %1332 = vmatprep.mubr.bf16.mxu0 %v1017
        %1333 = vmatmul.mubr.bf16.gmra.mrb[0].mxu0 %v1016
        %v1334 = vpop.f32.mrb[0].mxu0
        %v1335 = vadd.f32 0.0, %v1334
        %v1336 = vpop.f32.mrb[0].mxu0
        %v1337 = vpop.f32.mrb[0].mxu0
        %v1338 = vadd.f32 0.0, %v1337
        %v1339 = vpop.f32.mrb[0].mxu0
        %1340 = vdwg.mxu0
        %1341 = vmatprep.subr.bf16.mxu0 0
        %1342 = vmatpush1.bf16.msra.mxu0 %v1228
        %1343 = vmatprep.subr.bf16.mxu0 0
        %1344 = vmatpush1.bf16.msra.mxu0 %v1229
        %1345 = vmatprep.subr.bf16.mxu0 0
        %1346 = vmatpush1.bf16.msra.mxu0 %v1230
        %1347 = vmatprep.subr.bf16.mxu0 0
        %1348 = vmatpush1.bf16.msra.mxu0 %v1231
        %1349 = vmatprep.subr.bf16.mxu0 0
        %1350 = vmatpush1.bf16.msra.mxu0 %v1232
        %1351 = vmatprep.subr.bf16.mxu0 0
        %1352 = vmatpush1.bf16.msra.mxu0 %v1233
        %1353 = vmatprep.subr.bf16.mxu0 0
        %1354 = vmatpush1.bf16.msra.mxu0 %v1234
        %1355 = vmatprep.subr.bf16.mxu0 0
        %1356 = vmatpush1.bf16.msra.mxu0 %v1235
        %1357 = vmatprep.subr.bf16.mxu0 0
        %1358 = vmatpush1.bf16.msra.mxu0 %v1236
        %1359 = vmatprep.subr.bf16.mxu0 0
        %1360 = vmatpush1.bf16.msra.mxu0 %v1237
        %1361 = vmatprep.subr.bf16.mxu0 0
        %1362 = vmatpush1.bf16.msra.mxu0 %v1238
        %1363 = vmatprep.subr.bf16.mxu0 0
        %1364 = vmatpush1.bf16.msra.mxu0 %v1239
        %1365 = vmatprep.subr.bf16.mxu0 0
        %1366 = vmatpush1.bf16.msra.mxu0 %v1240
        %1367 = vmatprep.subr.bf16.mxu0 0
        %1368 = vmatpush1.bf16.msra.mxu0 %v1241
        %1369 = vmatprep.subr.bf16.mxu0 0
        %1370 = vmatpush1.bf16.msra.mxu0 %v1242
        %1371 = vmatprep.subr.bf16.mxu0 0
        %1372 = vmatpush1.bf16.msra.mxu0 %v1243
        %1373 = vmatprep.mubr.bf16.mxu0 %v1007
        %1374 = vmatmul.mubr.bf16.gmra.mrb[0].mxu0 %v1006
        %v1375 = vpop.f32.mrb[0].mxu0
        %v1376 = vadd.f32 %v1311, %v1375
        %v1377 = vpop.f32.mrb[0].mxu0
        %v1378 = vpop.f32.mrb[0].mxu0
        %v1379 = vadd.f32 %v1314, %v1378
        %v1380 = vpop.f32.mrb[0].mxu0
        %1381 = vmatprep.mubr.bf16.mxu0 %v1011
        %1382 = vmatmul.mubr.bf16.gmra.mrb[0].mxu0 %v1010
        %v1383 = vpop.f32.mrb[0].mxu0
        %v1384 = vadd.f32 %v1319, %v1383
        %v1385 = vpop.f32.mrb[0].mxu0
        %v1386 = vpop.f32.mrb[0].mxu0
        %v1387 = vadd.f32 %v1322, %v1386
        %v1388 = vpop.f32.mrb[0].mxu0
        %1389 = vmatprep.mubr.bf16.mxu0 %v1015
        %1390 = vmatmul.mubr.bf16.gmra.mrb[0].mxu0 %v1014
        %v1391 = vpop.f32.mrb[0].mxu0
        %v1392 = vadd.f32 %v1327, %v1391
        %v1393 = vpop.f32.mrb[0].mxu0
        %v1394 = vpop.f32.mrb[0].mxu0
        %v1395 = vadd.f32 %v1330, %v1394
        %v1396 = vpop.f32.mrb[0].mxu0
        %1397 = vmatprep.mubr.bf16.mxu0 %v1019
        %1398 = vmatmul.mubr.bf16.gmra.mrb[0].mxu0 %v1018
        %v1399 = vpop.f32.mrb[0].mxu0
        %v1400 = vadd.f32 %v1335, %v1399
        %v1401 = vpop.f32.mrb[0].mxu0
        %v1402 = vpop.f32.mrb[0].mxu0
        %v1403 = vadd.f32 %v1338, %v1402
        %v1404 = vpop.f32.mrb[0].mxu0
        %1405 = vdwg.mxu0
        %v1406 = vadd.f32 %v996, %v1376
        %v1407 = vadd.f32 %v997, %v1379
        %v1408 = vadd.f32 %v998, %v1384
        %v1409 = vadd.f32 %v999, %v1387
        %v1410 = vadd.f32 %v1000, %v1392
        %v1411 = vadd.f32 %v1001, %v1395
        %v1412 = vadd.f32 %v1002, %v1400
        %v1413 = vadd.f32 %v1003, %v1403
        %1414 = vst [vmem:[#allocation2] sm:$0xff] %v1406
        %1415 = vst [vmem:[#allocation2 + $0x8] sm:$0xff] %v1407
        %1416 = vst [vmem:[#allocation2 + $0x10] sm:$0xff] %v1408
        %1417 = vst [vmem:[#allocation2 + $0x18] sm:$0xff] %v1409
        %1418 = vst [vmem:[#allocation2 + $0x20] sm:$0xff] %v1410
        %1419 = vst [vmem:[#allocation2 + $0x28] sm:$0xff] %v1411
        %1420 = vst [vmem:[#allocation2 + $0x30] sm:$0xff] %v1412
        %1421 = vst [vmem:[#allocation2 + $0x38] sm:$0xff] %v1413
        // Predicated region
        $region57: #{tpu_custom_call.1} parent=39 // pred_check
          %p1422 = pneg %p324
        $region58: #{tpu_custom_call.1} parent=39 // pred_check_branch
          %1424 = sbr.rel (%p1422) target = $region60
        $region59: #{tpu_custom_call.1} parent=39 // pred_region
          %v1425 = vld [vmem:[#allocation2] sm:$0xff]
          %v1426 = vld [vmem:[#allocation2 + $0x8] sm:$0xff]
          %v1427 = vld [vmem:[#allocation2 + $0x10] sm:$0xff]
          %v1428 = vld [vmem:[#allocation2 + $0x18] sm:$0xff]
          %v1429 = vld [vmem:[#allocation2 + $0x20] sm:$0xff]
          %v1430 = vld [vmem:[#allocation2 + $0x28] sm:$0xff]
          %v1431 = vld [vmem:[#allocation2 + $0x30] sm:$0xff]
          %v1432 = vld [vmem:[#allocation2 + $0x38] sm:$0xff]
          %v1433 = vld [vmem:[%s4] sm:$0x1]
          %v1435 = vlaneseq
          %v1436 = vshrl.u32 %v1435, 7
          %v1437 = vsub.s32 0, %v1436
          %v1438 = vrot.slane %v1433, %v1437
          %v1440 = vadd.f32 %v1425, %v1438
          %v1441 = vadd.f32 %v1426, %v1438
          %v1442 = vadd.f32 %v1427, %v1438
          %v1443 = vadd.f32 %v1428, %v1438
          %v1444 = vadd.f32 %v1429, %v1438
          %v1445 = vadd.f32 %v1430, %v1438
          %v1446 = vadd.f32 %v1431, %v1438
          %v1447 = vadd.f32 %v1432, %v1438
          %1448 = vst [vmem:[%s313] sm:$0xff] %v1440
          %1449 = vst [vmem:[%s313 + $0x8] sm:$0xff] %v1441
          %1450 = vst [vmem:[%s313 + $0x10] sm:$0xff] %v1442
          %1451 = vst [vmem:[%s313 + $0x18] sm:$0xff] %v1443
          %1452 = vst [vmem:[%s313 + $0x20] sm:$0xff] %v1444
          %1453 = vst [vmem:[%s313 + $0x28] sm:$0xff] %v1445
          %1454 = vst [vmem:[%s313 + $0x30] sm:$0xff] %v1446
          %1455 = vst [vmem:[%s313 + $0x38] sm:$0xff] %v1447
        $region60: #{tpu_custom_call.1} parent=39 // pred_fallthru
          _
        %s1456 = sand.u32 %s168, 1
        %s1457 = scalar_lea.sflag [#allocation5], %s1456
        %s1458 = sand.u32 %s168, 1
        %s1459 = smul.addr %s1458, 64
        %s1460 = scalar_lea.vmem [#allocation9], %s1459
        // Predicated region
        $region61: #{tpu_custom_call.1} parent=39 // pred_check
          %p1461 = pneg %p178
        $region62: #{tpu_custom_call.1} parent=39 // pred_check_branch
          %1463 = sbr.rel (%p1461) target = $region64
        $region63: #{tpu_custom_call.1} parent=39 // pred_region
          %s1464 = smul.u32 8, %s27
          %s1466 = ssub.s32 1024, 1024
          %1467 = vsyncadd %s1457, %s1466
          %s1468 = smul.addr %s1464, 128
          %s1469 = scalar_lea.hbm %s5, %s1468
          %s1470 = sshll.u32 %s1460, 4
          %s1471 = int_to_ptr.vmem [resolvable:$true] %s1470
          %1476 = dma.vmem_to_hbm [thread:$0]  %s1471, 1024, %s1469, %s1457, 128, 128, 8
        $region64: #{tpu_custom_call.1} parent=39 // pred_fallthru
          _
      $region40: #{tpu_custom_call.1} parent=5 // pred_fallthru
        _
      %p1477 = scmp.le.s32.totalorder 2, %s18
      // Predicated region
      $region65: #{tpu_custom_call.1} parent=5 // pred_check
        %p1478 = pneg %p1477
      $region66: #{tpu_custom_call.1} parent=5 // pred_check_branch
        %1480 = sbr.rel (%p1478) target = $region68
      $region67: #{tpu_custom_call.1} parent=5 // pred_region
        %s1481 = ssub.s32 %s18, 2
        // Predicated region
        $region69: #{tpu_custom_call.1} parent=67 // pred_check
          %p1482 = pneg %p184
        $region70: #{tpu_custom_call.1} parent=67 // pred_check_branch
          %1484 = sbr.rel (%p1482) target = $region72
        $region71: #{tpu_custom_call.1} parent=67 // pred_region
          %s1485 = sand.u32 %s169, 1
          %s1486 = scalar_lea.sflag [#allocation5], %s1485
          %s1487 = sand.u32 %s169, 1
          %s1488 = smul.addr %s1487, 64
          %s1489 = scalar_lea.vmem [#allocation9], %s1488
          %1490 = dma.done %s1486, 1024
        $region72: #{tpu_custom_call.1} parent=67 // pred_fallthru
          _
      $region68: #{tpu_custom_call.1} parent=5 // pred_fallthru
        _
    $region6: #{tpu_custom_call.1} parent=1 // loop_footer
      %s22 = sadd.s32 1, %s18
    $region7: #{tpu_custom_call.1} parent=1 // loop_footer_branch
      %17 = sbr.rel target = $region3
    $region8: #{tpu_custom_call.1} parent=1 // loop_exit
      _
    %1491 = vsyncpa [#allocation4], 1
    %s1492 = scalar_lea.sflag [#allocation4], 1
    %1493 = vsyncpa %s1492, 1
    %1494 = vsyncpa [#allocation7], 1
    %1495 = vsyncpa [#allocation5], 1
    %s1496 = scalar_lea.sflag [#allocation5], 1
    %1497 = vsyncpa %s1496, 1

</llo_original>
